<compile_context>
chip_gen: v6e
topology: v6e:2x2x1
jax: 0.10.0
libtpu: 0.0.40
codegen_flags: <defaults>
</compile_context>

<pallas_src>
import functools
import math

import jax
import jax.numpy as jnp
from jax import lax
from jax.experimental import pallas as pl
from jax.experimental.pallas import tpu as pltpu


# ----------------------------------------------------------------------------
# One-off probe: pick the cheapest supported circular-shear implementation.
# Needed permutation: y[s, t] = r[s, (t + s) % L]  (row s left-rotated by s).
# ----------------------------------------------------------------------------
@functools.lru_cache(maxsize=None)
def _shear_mode(L):
    x = jnp.arange(L * L, dtype=jnp.float32).reshape(L, L)
    shift_idx = (jnp.arange(L)[None, :] + jnp.arange(L)[:, None]) % L
    expected = jnp.take_along_axis(x, shift_idx, axis=1)
    for stride in (1, L - 1, -1):
        try:
            def probe(x_ref, o_ref, _s=stride):
                o_ref[...] = pltpu.roll(x_ref[...], 0, 1,
                                        stride=_s, stride_axis=0)
            out = pl.pallas_call(
                probe,
                out_shape=jax.ShapeDtypeStruct((L, L), jnp.float32))(x)
            if bool(jnp.array_equal(out, expected)):
                return ("roll", stride)
        except Exception:       # unsupported stride / lowering error -> next
            pass
    return ("select", 0)        # proven fallback (log2(L) select shear)


# ----------------------------------------------------------------------------
# In-kernel helpers (operate on loaded jnp arrays; all shapes static).
# ----------------------------------------------------------------------------
def _shift_replicate(x, offset):
    """y[t] = x[clip(t + offset, 0, L-1)] for a (L, D) array (edge replicate)."""
    if offset == 0:
        return x
    if offset > 0:
        return jnp.concatenate([x[offset:]] + [x[-1:]] * offset, axis=0)
    o = -offset
    return jnp.concatenate([x[:1]] * o + [x[:-o]], axis=0)


def _moving_average(x, kernel_size):
    """Replicate-padded moving average along axis 0 (== edge-pad + AvgPool1d).

    Direct k-tap windowed sum: decomposition kernels are small (<= ~33), and
    the direct sum avoids the prefix-sum's serial chain and cancellation."""
    pad = (kernel_size - 1) // 2
    if pad == 0:
        return x
    acc = x
    for off in range(1, pad + 1):
        acc = acc + _shift_replicate(x, off) + _shift_replicate(x, -off)
    return acc * (1.0 / kernel_size)


def _conv3_taps(x):
    """(L, Cin) -> (L, 3*Cin) slab of the three replicate-padded taps."""
    return jnp.concatenate(
        [_shift_replicate(x, -1), x, _shift_replicate(x, 1)], axis=1)


def _conv3(x, w_ref):
    """Conv1d over time, kernel=3, padding=1 (replicate), bias=False, as a
    single matmul.  x: (L, Cin) f32; w_ref: (3*Cin, Cout) (pre-fused weight)."""
    return jnp.dot(_conv3_taps(x).astype(w_ref.dtype), w_ref[...],
                   preferred_element_type=jnp.float32)


def _leaky_relu(x, slope):
    return jnp.where(x >= 0, x, slope * x)


def _circular_corr(q, k, dh, shear):
    """corr[tau] = (1/dh) * sum_t <q[t,:], k[(t - tau) % L, :]>  ->  (1, L) f32.

    Equals irfft(rfft(q) * conj(rfft(k))) averaged over channels.  Computed as
    one MXU matmul (K Q^T) followed by a circular row shear (row s rotated
    left by s) and a single column sum.  The shear is one strided XLU rotate
    (mode "roll", verified by the probe) or the select-shear fallback."""
    L = q.shape[0]
    r = lax.dot_general(k, q, (((1,), (1,)), ((), ())),
                        preferred_element_type=jnp.float32)   # r[s,u] = <k_s, q_u>
    if shear[0] == "roll":
        y = pltpu.roll(r, 0, 1, stride=shear[1], stride_axis=0)
    else:
        row = lax.broadcasted_iota(jnp.int32, (L, L), 0)
        y = r
        m = 1
        while m < L:
            y_rot = jnp.concatenate([y[:, m:], y[:, :m]], axis=1)  # left by m
            y = jnp.where((row & m) != 0, y_rot, y)
            m *= 2
    # After the shear, y[s, tau] = <k_s, q_{(tau+s) % L}>, so the column sum
    # over s is exactly sum_t <q_t, k_{(t - tau) % L}>.
    return jnp.sum(y, axis=0, keepdims=True) * (1.0 / dh)


def _delay_aggregate(v, vbuf_ref, idx_ref, w_ref, b, top_k, L, dh):
    """agg[t] = sum_i w[b,i] * v[(t + idx[i]) % L] using a doubled VMEM buffer
    and dynamic-start slices (no (L,L) aggregation matrix).  w comes from SMEM
    as scalars (splat), idx from the scalar-prefetch SMEM ref."""
    v32 = v.astype(jnp.float32)
    vbuf_ref[0:L, :] = v32
    vbuf_ref[L:2 * L, :] = v32
    agg = jnp.zeros((L, dh), jnp.float32)
    for i in range(top_k):                       # top_k ~ factor*ln(L): tiny
        shift = idx_ref[i]                       # int32 scalar (SMEM)
        w = w_ref[b, i]                          # f32 scalar (SMEM)
        agg = agg + w * vbuf_ref[pl.ds(shift, L), :]
    return agg


# ----------------------------------------------------------------------------
# Stage 1: fused QKV projection of seasonal_init + autocorrelation scores.
# ----------------------------------------------------------------------------
def _stage1_kernel(xs_ref, wqkv_ref, bqkv_ref, v_ref, corr_ref, *, dh, shear):
    cdt = wqkv_ref.dtype
    x = xs_ref[0].astype(cdt)                                       # (L, Din)
    qkv = jnp.dot(x, wqkv_ref[...],
                  preferred_element_type=jnp.float32) + bqkv_ref[...]
    q = qkv[:, :dh]
    k = qkv[:, dh:2 * dh]
    v = qkv[:, 2 * dh:3 * dh]
    v_ref[0] = v.astype(v_ref.dtype)
    corr_ref[0] = _circular_corr(q.astype(cdt), k.astype(cdt), dh, shear)


# ----------------------------------------------------------------------------
# Stage 2: delay-agg 1 + out-proj + residual + decomp_1 + cross-attn scores.
# ----------------------------------------------------------------------------
def _stage2_kernel(idx_ref, v1_ref, xs_ref, enc_ref, w1_ref,
                   wo1_ref, bo1_ref, wq2_ref, bq2_ref, wkv2_ref, bkv2_ref,
                   ac1_ref, v2_ref, corr2_ref, vbuf_ref, *,
                   dh, dec_kernel, top_k, shear):
    cdt = wo1_ref.dtype
    L = xs_ref.shape[1]
    b = pl.program_id(0)
    agg = _delay_aggregate(v1_ref[0], vbuf_ref, idx_ref, w1_ref, b,
                           top_k, L, dh)
    ac1 = (jnp.dot(agg.astype(cdt), wo1_ref[...],
                   preferred_element_type=jnp.float32)
           + bo1_ref[...] + xs_ref[0].astype(jnp.float32))          # autocorr_1
    ac1_ref[0] = ac1.astype(ac1_ref.dtype)                          # f32 stream
    # decomp_1 seasonal part feeds the cross autocorrelation's queries
    season1 = ac1 - _moving_average(ac1, dec_kernel)
    q2 = (jnp.dot(season1.astype(cdt), wq2_ref[...],
                  preferred_element_type=jnp.float32) + bq2_ref[...])
    kv2 = (jnp.dot(enc_ref[0].astype(cdt), wkv2_ref[...],
                   preferred_element_type=jnp.float32) + bkv2_ref[...])
    k2 = kv2[:, :dh]
    v2 = kv2[:, dh:2 * dh]
    v2_ref[0] = v2.astype(v2_ref.dtype)
    corr2_ref[0] = _circular_corr(q2.astype(cdt), k2.astype(cdt), dh, shear)


# ----------------------------------------------------------------------------
# Stage 3: delay-agg 2 + proj + residual + decomp_2 + conv FF + decomp_3
#          + LayerNorm + fused trend convs + seasonal conv (fully fused).
# ----------------------------------------------------------------------------
def _stage3_kernel(idx_ref, ac1_ref, v2_ref, w2_ref, trend_init_ref,
                   wo2_ref, bo2_ref, wtr_ref, wff1_ref, wff2_ref, wsea_ref,
                   gamma_ref, beta_ref, season_ref, trend_ref, vbuf_ref, *,
                   dh, dec_kernel, top_k, slope, eps):
    cdt = wo2_ref.dtype
    L = ac1_ref.shape[1]
    b = pl.program_id(0)
    ac1 = ac1_ref[0].astype(jnp.float32)
    ma1 = _moving_average(ac1, dec_kernel)
    season1 = ac1 - ma1
    # ---- layer-2 time-delay aggregation + projection + residual ----
    agg = _delay_aggregate(v2_ref[0], vbuf_ref, idx_ref, w2_ref, b,
                           top_k, L, dh)
    ac2 = (jnp.dot(agg.astype(cdt), wo2_ref[...],
                   preferred_element_type=jnp.float32)
           + bo2_ref[...] + season1)                                # autocorr_2
    ma2 = _moving_average(ac2, dec_kernel)
    season2 = ac2 - ma2
    # ---- conv feed-forward on the seasonal part ----
    h = _leaky_relu(_conv3(season2, wff1_ref), slope)
    y = _leaky_relu(_conv3(h, wff2_ref), slope) + season2
    ma3 = _moving_average(y, dec_kernel)
    season3 = y - ma3
    # ---- LayerNorm + final seasonal convolution (lane-dense output) ----
    mu = jnp.mean(season3, axis=-1, keepdims=True)
    var = jnp.mean(jnp.square(season3 - mu), axis=-1, keepdims=True)
    ln = (season3 - mu) * lax.rsqrt(var + eps) * gamma_ref[...] + beta_ref[...]
    season_ref[0] = _conv3(ln, wsea_ref).astype(season_ref.dtype)
    # ---- three trend convolutions fused into ONE K = 9*Dh MXU matmul ----
    x9 = jnp.concatenate([_conv3_taps(ma1), _conv3_taps(ma2),
                          _conv3_taps(ma3)], axis=1)                # (L, 9*Dh)
    trend = jnp.dot(x9.astype(cdt), wtr_ref[...],
                    preferred_element_type=jnp.float32)
    trend_ref[0] = (trend_init_ref[0].astype(jnp.float32)
                    + trend).astype(trend_ref.dtype)


# ----------------------------------------------------------------------------
# Glue: global ('train'-flag) top-k delay selection + softmax (tiny, XLA).
# ----------------------------------------------------------------------------
def _topk_delays(mean_value, top_k):
    _, index = lax.top_k(jnp.mean(mean_value, axis=0), top_k)       # (top_k,)
    weights = jnp.take(mean_value, index, axis=1)                   # (B, top_k)
    tmp_corr = jax.nn.softmax(weights, axis=-1).astype(jnp.float32)
    return index.astype(jnp.int32), tmp_corr


# ----------------------------------------------------------------------------
# Wrapper.
# ----------------------------------------------------------------------------
def decoder_forward(seasonal_init, trend_init, encoder_output, params, *,
                    heads, factor, decomposition_kernel,
                    negative_slope=0.01, ln_eps=1e-5,
                    compute_dtype=jnp.bfloat16):
    f32 = jnp.float32
    cdt = compute_dtype

    B, L, Din = seasonal_init.shape
    Dh = params["wq1"].shape[0]
    Do = params["wt1"].shape[0]
    Cf = params["wf1"].shape[0]
    Be, Le, De = encoder_output.shape

    assert Din == Dh, "residual `ac_layer_1(x,x,x) + x` needs input == hidden"
    assert (Be, De) == (B, Dh)
    # TODO(synk): Autoformer truncates/zero-pads keys & values when the encoder
    # length differs from the decoder length; only equal lengths implemented.
    assert Le == L
    assert Dh % heads == 0
    assert decomposition_kernel % 2 == 1, "decomposition kernel must be odd"
    assert (decomposition_kernel - 1) // 2 < L
    assert trend_init.shape == (B, L, Do)

    top_k = max(1, min(L, int(factor * math.log(L))))
    Do_pad = max(Do, ((Do + 127) // 128) * 128)       # lane-dense final outputs
    shear = _shear_mode(L)

    # ---- pre-transposed / stacked weights (fused QKV & KV projections) ----
    wqkv1 = jnp.concatenate([params["wq1"].T, params["wk1"].T,
                             params["wv1"].T], axis=1).astype(cdt)   # (Din, 3Dh)
    bqkv1 = jnp.concatenate([params["bq1"], params["bk1"],
                             params["bv1"]]).reshape(1, 3 * Dh).astype(f32)
    wo1 = params["wo1"].T.astype(cdt)
    bo1 = params["bo1"].reshape(1, Dh).astype(f32)
    wq2 = params["wq2"].T.astype(cdt)
    bq2 = params["bq2"].reshape(1, Dh).astype(f32)
    wkv2 = jnp.concatenate([params["wk2"].T, params["wv2"].T],
                           axis=1).astype(cdt)                       # (Dh, 2Dh)
    bkv2 = jnp.concatenate([params["bk2"],
                            params["bv2"]]).reshape(1, 2 * Dh).astype(f32)
    wo2 = params["wo2"].T.astype(cdt)
    bo2 = params["bo2"].reshape(1, Dh).astype(f32)

    def conv_cat(w, cout_pad=None):  # torch (Cout, Cin, 3) -> fused (3*Cin, Cout)
        cout, cin, _ = w.shape
        wc = jnp.transpose(w, (2, 1, 0)).reshape(3 * cin, cout)
        if cout_pad is not None and cout_pad > cout:
            wc = jnp.pad(wc, ((0, 0), (0, cout_pad - cout)))
        return wc.astype(cdt)

    # three trend convs stacked along K -> one (9*Dh, Do_pad) matmul weight
    wtrend = jnp.concatenate([conv_cat(params["wt1"], Do_pad),
                              conv_cat(params["wt2"], Do_pad),
                              conv_cat(params["wt3"], Do_pad)], axis=0)
    wf1c, wf2c = conv_cat(params["wf1"]), conv_cat(params["wf2"])
    wseac = conv_cat(params["wsea"], Do_pad)
    gamma = params["gamma"].reshape(1, Dh).astype(f32)
    beta = params["beta"].reshape(1, Dh).astype(f32)

    # activations fed in the compute dtype (halves DMA bytes on the bf16 path)
    seasonal_in = seasonal_init.astype(cdt)
    encoder_in = encoder_output.astype(cdt)
    if Do_pad != Do:
        trend_pad = jnp.pad(trend_init, ((0, 0), (0, 0), (0, Do_pad - Do)))
    else:
        trend_pad = trend_init
    trend_in = trend_pad.astype(cdt)

    per_b = lambda r, c: pl.BlockSpec((1, r, c), lambda b, *_: (b, 0, 0))
    const2 = lambda r, c: pl.BlockSpec((r, c), lambda b, *_: (0, 0))
    smem_spec = pl.BlockSpec(memory_space=pltpu.MemorySpace.SMEM)
    cparams = pltpu.CompilerParams(dimension_semantics=("parallel",),
                                   vmem_limit_bytes=32 * 1024 * 1024)

    # -------------------- stage 1 --------------------
    v1, corr1 = pl.pallas_call(
        functools.partial(_stage1_kernel, dh=Dh, shear=shear),
        out_shape=(jax.ShapeDtypeStruct((B, L, Dh), cdt),
                   jax.ShapeDtypeStruct((B, 1, L), f32)),
        grid=(B,),
        in_specs=[per_b(L, Din), const2(Din, 3 * Dh), const2(1, 3 * Dh)],
        out_specs=(per_b(L, Dh), per_b(1, L)),
        compiler_params=cparams,
    )(seasonal_in, wqkv1, bqkv1)

    index1, tmp1 = _topk_delays(corr1[:, 0, :], top_k)

    # -------------------- stage 2 --------------------
    gs2 = pltpu.PrefetchScalarGridSpec(
        num_scalar_prefetch=1, grid=(B,),
        in_specs=[per_b(L, Dh),              # v1
                  per_b(L, Din),             # seasonal_init (residual)
                  per_b(L, Dh),              # encoder_output
                  smem_spec,                 # softmax weights (layer 1), SMEM
                  const2(Dh, Dh), const2(1, Dh),           # wo1, bo1
                  const2(Dh, Dh), const2(1, Dh),           # wq2, bq2
                  const2(Dh, 2 * Dh), const2(1, 2 * Dh)],  # wkv2, bkv2
        out_specs=(per_b(L, Dh), per_b(L, Dh), per_b(1, L)),
        scratch_shapes=[pltpu.VMEM((2 * L, Dh), f32)])
    ac1, v2, corr2 = pl.pallas_call(
        functools.partial(_stage2_kernel, dh=Dh,
                          dec_kernel=decomposition_kernel, top_k=top_k,
                          shear=shear),
        out_shape=(jax.ShapeDtypeStruct((B, L, Dh), f32),   # residual kept f32
                   jax.ShapeDtypeStruct((B, L, Dh), cdt),
                   jax.ShapeDtypeStruct((B, 1, L), f32)),
        grid_spec=gs2,
        compiler_params=cparams,
    )(index1, v1, seasonal_in, encoder_in, tmp1,
      wo1, bo1, wq2, bq2, wkv2, bkv2)

    index2, tmp2 = _topk_delays(corr2[:, 0, :], top_k)

    # -------------------- stage 3 --------------------
    gs3 = pltpu.PrefetchScalarGridSpec(
        num_scalar_prefetch=1, grid=(B,),
        in_specs=[per_b(L, Dh),              # autocorr_1 (f32)
                  per_b(L, Dh),              # v2
                  smem_spec,                 # softmax weights (layer 2), SMEM
                  per_b(L, Do_pad),          # trend_init (padded)
                  const2(Dh, Dh), const2(1, Dh),           # wo2, bo2
                  const2(9 * Dh, Do_pad),                  # fused trend convs
                  const2(3 * Dh, Cf), const2(3 * Cf, Dh),  # conv_ff 1/2
                  const2(3 * Dh, Do_pad),                  # conv_season
                  const2(1, Dh), const2(1, Dh)],           # gamma, beta
        out_specs=(per_b(L, Do_pad), per_b(L, Do_pad)),
        scratch_shapes=[pltpu.VMEM((2 * L, Dh), f32)])
    season_out, trend_out = pl.pallas_call(
        functools.partial(_stage3_kernel, dh=Dh,
                          dec_kernel=decomposition_kernel, top_k=top_k,
                          slope=negative_slope, eps=ln_eps),
        out_shape=(jax.ShapeDtypeStruct((B, L, Do_pad), f32),
                   jax.ShapeDtypeStruct((B, L, Do_pad), f32)),
        grid_spec=gs3,
        compiler_params=cparams,
    )(index2, ac1, v2, tmp2, trend_in,
      wo2, bo2, wtrend, wf1c, wf2c, wseac, gamma, beta)

    return season_out[:, :, :Do], trend_out[:, :, :Do]


# ----------------------------------------------------------------------------
# Deterministic parameter init (PyTorch-style default bounds).
# ----------------------------------------------------------------------------
def init_params(key, input_features, hidden_features, convolution_features,
                output_features):
    ks = jax.random.split(key, 14)

    def linear(k, fan_in, fan_out):
        bound = 1.0 / math.sqrt(fan_in)
        kw, kb = jax.random.split(k)
        w = jax.random.uniform(kw, (fan_out, fan_in), jnp.float32, -bound, bound)
        b = jax.random.uniform(kb, (fan_out,), jnp.float32, -bound, bound)
        return w, b

    def conv(k, cin, cout):
        bound = 1.0 / math.sqrt(cin * 3)
        return jax.random.uniform(k, (cout, cin, 3), jnp.float32, -bound, bound)

    wq1, bq1 = linear(ks[0], input_features, hidden_features)
    wk1, bk1 = linear(ks[1], input_features, hidden_features)
    wv1, bv1 = linear(ks[2], input_features, hidden_features)
    wo1, bo1 = linear(ks[3], hidden_features, hidden_features)
    wq2, bq2 = linear(ks[4], hidden_features, hidden_features)
    wk2, bk2 = linear(ks[5], hidden_features, hidden_features)
    wv2, bv2 = linear(ks[6], hidden_features, hidden_features)
    wo2, bo2 = linear(ks[7], hidden_features, hidden_features)
    wt1 = conv(ks[8], hidden_features, output_features)
    wt2 = conv(ks[9], hidden_features, output_features)
    wt3 = conv(ks[10], hidden_features, output_features)
    wf1 = conv(ks[11], hidden_features, convolution_features)
    wf2 = conv(ks[12], convolution_features, hidden_features)
    wsea = conv(ks[13], hidden_features, output_features)
    return dict(wq1=wq1, bq1=bq1, wk1=wk1, bk1=bk1, wv1=wv1, bv1=bv1,
                wo1=wo1, bo1=bo1, wq2=wq2, bq2=bq2, wk2=wk2, bk2=bk2,
                wv2=wv2, bv2=bv2, wo2=wo2, bo2=bo2,
                wt1=wt1, wt2=wt2, wt3=wt3, wf1=wf1, wf2=wf2, wsea=wsea,
                gamma=jnp.ones((hidden_features,), jnp.float32),
                beta=jnp.zeros((hidden_features,), jnp.float32))


# ----------------------------------------------------------------------------
# Pure-JAX reference (FFT- or time-domain autocorrelation) for sanity check.
# ----------------------------------------------------------------------------
def _moving_avg_ref(x, k):
    pad = (k - 1) // 2
    L = x.shape[1]
    xp = jnp.concatenate([jnp.repeat(x[:, :1], pad, axis=1), x,
                          jnp.repeat(x[:, -1:], pad, axis=1)], axis=1)
    acc = 0.0
    for j in range(k):
        acc = acc + xp[:, j:j + L]
    return acc / k


def _conv1d_ref(x, w):
    L = x.shape[1]
    xp = jnp.concatenate([x[:, :1], x, x[:, -1:]], axis=1)
    out = 0.0
    for j in range(3):
        out = out + jnp.einsum("blc,oc->blo", xp[:, j:j + L], w[:, :, j])
    return out


def _corr_ref(qh, kh, use_fft):
    L = qh.shape[-1]
    if use_fft:
        return jnp.fft.irfft(jnp.fft.rfft(qh, axis=-1) *
                             jnp.conj(jnp.fft.rfft(kh, axis=-1)), n=L, axis=-1)
    # mathematically identical time-domain form (different rounding)
    return jnp.stack([jnp.sum(qh * jnp.roll(kh, tau, axis=-1), axis=-1)
                      for tau in range(L)], axis=-1)


def _autocorr_layer_ref(q_in, kv_in, wq, bq, wk, bk, wv, bv, wo, bo,
                        heads, factor, use_fft):
    B, L, _ = q_in.shape
    Dh = wq.shape[0]
    q = q_in @ wq.T + bq
    k = kv_in @ wk.T + bk
    v = kv_in @ wv.T + bv
    H, E = heads, Dh // heads
    qh = q.reshape(B, L, H, E).transpose(0, 2, 3, 1)
    kh = k.reshape(B, L, H, E).transpose(0, 2, 3, 1)
    vh = v.reshape(B, L, H, E).transpose(0, 2, 3, 1)
    corr = _corr_ref(qh, kh, use_fft)
    top_k = max(1, min(L, int(factor * math.log(L))))
    mean_value = corr.mean(axis=1).mean(axis=1)
    idx = lax.top_k(mean_value.mean(axis=0), top_k)[1]
    weights = mean_value[:, idx]
    tmp_corr = jax.nn.softmax(weights, axis=-1)
    agg = jnp.zeros_like(vh)
    for i in range(top_k):
        agg = agg + jnp.roll(vh, -idx[i], axis=-1) * tmp_corr[:, i][:, None, None, None]
    V = agg.transpose(0, 3, 1, 2).reshape(B, L, Dh)
    return V @ wo.T + bo


def decoder_reference(seasonal_init, trend_init, encoder_output, p, *,
                      heads, factor, decomposition_kernel,
                      slope=0.01, eps=1e-5, use_fft=True):
    with jax.default_matmul_precision("highest"):
        leaky = lambda t: jnp.where(t >= 0, t, slope * t)
        dk = decomposition_kernel
        ac1 = _autocorr_layer_ref(seasonal_init, seasonal_init,
                                  p["wq1"], p["bq1"], p["wk1"], p["bk1"],
                                  p["wv1"], p["bv1"], p["wo1"], p["bo1"],
                                  heads, factor, use_fft) + seasonal_init
        ma1 = _moving_avg_ref(ac1, dk)
        season1 = ac1 - ma1
        trend1 = _conv1d_ref(ma1, p["wt1"])
        ac2 = _autocorr_layer_ref(season1, encoder_output,
                                  p["wq2"], p["bq2"], p["wk2"], p["bk2"],
                                  p["wv2"], p["bv2"], p["wo2"], p["bo2"],
                                  heads, factor, use_fft) + season1
        ma2 = _moving_avg_ref(ac2, dk)
        season2 = ac2 - ma2
        trend2 = _conv1d_ref(ma2, p["wt2"])
        h = leaky(_conv1d_ref(season2, p["wf1"]))
        y = leaky(_conv1d_ref(h, p["wf2"])) + season2
        ma3 = _moving_avg_ref(y, dk)
        season3 = y - ma3
        trend3 = _conv1d_ref(ma3, p["wt3"])
        mu = season3.mean(-1, keepdims=True)
        var = ((season3 - mu) ** 2).mean(-1, keepdims=True)
        ln = (season3 - mu) / jnp.sqrt(var + eps) * p["gamma"] + p["beta"]
        season_out = _conv1d_ref(ln, p["wsea"])
        trend_out = trend_init + trend1 + trend2 + trend3
        return season_out, trend_out


# ----------------------------------------------------------------------------
if __name__ == "__main__":
    B, L = 2, 128
    input_features = 32
    hidden_features = 32           # must equal input_features (residual add)
    convolution_features = 64
    output_features = 32
    heads = 4
    factor = 1
    decomposition_kernel = 25
    # flag = 'train'  (global top-k delay-aggregation path)

    key = jax.random.PRNGKey(0)
    ks, kt, ke, kp = jax.random.split(key, 4)
    seasonal_init = jax.random.normal(ks, (B, L, input_features), jnp.float32)
    trend_init = jax.random.normal(kt, (B, L, output_features), jnp.float32)
    encoder_output = jax.random.normal(ke, (B, L, hidden_features), jnp.float32)
    params = init_params(kp, input_features, hidden_features,
                         convolution_features, output_features)

    run = functools.partial(decoder_forward, heads=heads, factor=factor,
                            decomposition_kernel=decomposition_kernel)

    # f32 compute path: strict numerical check against the reference.
    season_f32, trend_f32 = run(seasonal_init, trend_init, encoder_output,
                                params, compute_dtype=jnp.float32)
    jax.block_until_ready((season_f32, trend_f32))

    def _err(a, b):
        return float(jnp.max(jnp.abs(a - b)))

    def _close(a, b, tol=2e-2):
        return _err(a, b) <= tol * (float(jnp.max(jnp.abs(b))) + 1.0)

    finite = bool(jnp.all(jnp.isfinite(season_f32))) and \
             bool(jnp.all(jnp.isfinite(trend_f32)))

    # Primary check vs FFT reference; if a float-rounding top-k tie flips the
    # discrete delay selection, fall back to the (identical-math) time-domain
    # reference before declaring a mismatch.
    ok = False
    last = (None, None)
    for use_fft in (True, False):
        season_ref, trend_ref = decoder_reference(
            seasonal_init, trend_init, encoder_output, params,
            heads=heads, factor=factor,
            decomposition_kernel=decomposition_kernel, use_fft=use_fft)
        last = (_err(season_f32, season_ref), _err(trend_f32, trend_ref))
        if _close(season_f32, season_ref) and _close(trend_f32, trend_ref):
            ok = True
            break
    if not (ok and finite):
        raise SystemExit(f"mismatch vs reference: season err={last[0]}, "
                         f"trend err={last[1]}, finite={finite}")

    # bf16 fast path (performance configuration): smoke test (finite outputs).
    season_bf, trend_bf = run(seasonal_init, trend_init, encoder_output,
                              params, compute_dtype=jnp.bfloat16)
    jax.block_until_ready((season_bf, trend_bf))
    if not (bool(jnp.all(jnp.isfinite(season_bf))) and
            bool(jnp.all(jnp.isfinite(trend_bf)))):
        raise SystemExit("bf16 path produced non-finite values")

    print("KERNEL_OK")
</pallas_src>

<mosaic_0001>
module attributes {stable_mosaic.version = 11 : i64} {
  func.func @probe(%arg0: memref<128x128xf32, #tpu.memory_space<vmem>>, %arg1: memref<128x128xf32, #tpu.memory_space<vmem>>) attributes {dimension_semantics = [], scalar_prefetch = 0 : i64, scratch_operands = 0 : i64, tpu.core_type = #tpu.core_type<tc>} {
    %c0 = arith.constant 0 : index
    %c0_0 = arith.constant 0 : index
    %0 = vector.load %arg0[%c0, %c0_0] : memref<128x128xf32, #tpu.memory_space<vmem>>, vector<128x128xf32>
    %c0_i32 = arith.constant 0 : i32
    %1 = tpu.dynamic_rotate %0 by %c0_i32 dim 1 {stride = 1 : si32, stride_dimension = 0 : si32} : vector<128x128xf32>, i32 -> vector<128x128xf32>
    %c0_1 = arith.constant 0 : index
    %c0_2 = arith.constant 0 : index
    %2 = vector.load %arg1[%c0_1, %c0_2] : memref<128x128xf32, #tpu.memory_space<vmem>>, vector<128x128xf32>
    tpu.vector_store %arg1[%c0_1, %c0_2], %1 {strides = array<i32>} : memref<128x128xf32, #tpu.memory_space<vmem>>, vector<128x128xf32>,
    return
  }
}

module attributes {stable_mosaic.version = 11 : i64} {
  func.func @probe(%arg0: memref<128x128xf32, #tpu.memory_space<vmem>>, %arg1: memref<128x128xf32, #tpu.memory_space<vmem>>) attributes {dimension_semantics = [], scalar_prefetch = 0 : i64, scratch_operands = 0 : i64, tpu.core_type = #tpu.core_type<tc>} {
    %c0 = arith.constant 0 : index
    %c0_0 = arith.constant 0 : index
    %0 = vector.load %arg0[%c0, %c0_0] : memref<128x128xf32, #tpu.memory_space<vmem>>, vector<128x128xf32>
    %c0_i32 = arith.constant 0 : i32
    %1 = tpu.dynamic_rotate %0 by %c0_i32 dim 1 {stride = 127 : si32, stride_dimension = 0 : si32} : vector<128x128xf32>, i32 -> vector<128x128xf32>
    %c0_1 = arith.constant 0 : index
    %c0_2 = arith.constant 0 : index
    %2 = vector.load %arg1[%c0_1, %c0_2] : memref<128x128xf32, #tpu.memory_space<vmem>>, vector<128x128xf32>
    tpu.vector_store %arg1[%c0_1, %c0_2], %1 {strides = array<i32>} : memref<128x128xf32, #tpu.memory_space<vmem>>, vector<128x128xf32>,
    return
  }
}

module attributes {stable_mosaic.version = 11 : i64} {
  func.func @_stage1_kernel(%arg0: i32, %arg1: memref<1x128x32xf32, #tpu.memory_space<vmem>>, %arg2: memref<32x96xf32, #tpu.memory_space<vmem>>, %arg3: memref<1x96xf32, #tpu.memory_space<vmem>>, %arg4: memref<1x128x32xf32, #tpu.memory_space<vmem>>, %arg5: memref<1x1x128xf32, #tpu.memory_space<vmem>>) attributes {dimension_semantics = [#tpu.dimension_semantics<parallel>], iteration_bounds = array<i64: 2>, scalar_prefetch = 0 : i64, scratch_operands = 0 : i64, tpu.core_type = #tpu.core_type<tc>, window_params = [{transform_indices = @transform_0, window_bounds = array<i64: 1, 128, 32>}, {pipeline_mode = #tpu.pipeline_mode<synchronous>, transform_indices = @transform_1, window_bounds = array<i64: 32, 96>}, {pipeline_mode = #tpu.pipeline_mode<synchronous>, transform_indices = @transform_2, window_bounds = array<i64: 1, 96>}, {transform_indices = @transform_3, window_bounds = array<i64: 1, 128, 32>}, {transform_indices = @transform_4, window_bounds = array<i64: 1, 1, 128>}]} {
    %c0 = arith.constant 0 : index
    %c0_0 = arith.constant 0 : index
    %c0_1 = arith.constant 0 : index
    %0 = vector.load %arg1[%c0, %c0_0, %c0_1] : memref<1x128x32xf32, #tpu.memory_space<vmem>>, vector<1x128x32xf32>
    %1 = vector.shape_cast %0 : vector<1x128x32xf32> to vector<128x32xf32>
    %c0_2 = arith.constant 0 : index
    %c0_3 = arith.constant 0 : index
    %2 = vector.load %arg2[%c0_2, %c0_3] : memref<32x96xf32, #tpu.memory_space<vmem>>, vector<32x96xf32>
    %cst = arith.constant dense<0.000000e+00> : vector<128x96xf32>
    %3 = tpu.matmul %1, %2, %cst {dimension_numbers = #tpu.dot_dimension_numbers<[1], [0], [0], [1], [0, 0, 1, 1], [], []>} : vector<128x32xf32>, vector<32x96xf32>, vector<128x96xf32> -> vector<128x96xf32>
    %c0_4 = arith.constant 0 : index
    %c0_5 = arith.constant 0 : index
    %4 = vector.load %arg3[%c0_4, %c0_5] : memref<1x96xf32, #tpu.memory_space<vmem>>, vector<1x96xf32>
    %5 = vector.broadcast %4 : vector<1x96xf32> to vector<128x96xf32>
    %6 = arith.addf %3, %5 : vector<128x96xf32>
    %7 = vector.extract_strided_slice %6 {offsets = [0, 0], sizes = [128, 32], strides = [1, 1]} : vector<128x96xf32> to vector<128x32xf32>
    %8 = vector.extract_strided_slice %6 {offsets = [0, 32], sizes = [128, 32], strides = [1, 1]} : vector<128x96xf32> to vector<128x32xf32>
    %9 = vector.extract_strided_slice %6 {offsets = [0, 64], sizes = [128, 32], strides = [1, 1]} : vector<128x96xf32> to vector<128x32xf32>
    %c0_6 = arith.constant 0 : index
    %c0_7 = arith.constant 0 : index
    %c0_8 = arith.constant 0 : index
    %10 = vector.load %arg4[%c0_6, %c0_7, %c0_8] : memref<1x128x32xf32, #tpu.memory_space<vmem>>, vector<1x128x32xf32>
    %11 = vector.shape_cast %10 : vector<1x128x32xf32> to vector<128x32xf32>
    %12 = vector.shape_cast %9 : vector<128x32xf32> to vector<1x128x32xf32>
    tpu.vector_store %arg4[%c0_6, %c0_7, %c0_8], %12 {strides = array<i32>} : memref<1x128x32xf32, #tpu.memory_space<vmem>>, vector<1x128x32xf32>,
    %cst_9 = arith.constant dense<0.000000e+00> : vector<128x128xf32>
    %13 = tpu.matmul %8, %7, %cst_9 {dimension_numbers = #tpu.dot_dimension_numbers<[1], [1], [0], [0], [0, 0, 1, 0], [], []>} : vector<128x32xf32>, vector<128x32xf32>, vector<128x128xf32> -> vector<128x128xf32>
    %14 = tpu.iota {dimensions = array<i32: 0>} : vector<128x128xi32>
    %15 = vector.extract_strided_slice %13 {offsets = [0, 1], sizes = [128, 127], strides = [1, 1]} : vector<128x128xf32> to vector<128x127xf32>
    %16 = vector.extract_strided_slice %13 {offsets = [0, 0], sizes = [128, 1], strides = [1, 1]} : vector<128x128xf32> to vector<128x1xf32>
    %17 = tpu.concatenate %15, %16 in 1 : vector<128x127xf32>, vector<128x1xf32> -> vector<128x128xf32>
    %c1_i32 = arith.constant 1 : i32
    %18 = vector.broadcast %c1_i32 : i32 to vector<128x128xi32>
    %19 = arith.andi %14, %18 : vector<128x128xi32>
    %c0_i32 = arith.constant 0 : i32
    %20 = vector.broadcast %c0_i32 : i32 to vector<128x128xi32>
    %21 = arith.cmpi ne, %19, %20 : vector<128x128xi32>
    %22 = arith.select %21, %17, %13 : vector<128x128xi1>, vector<128x128xf32>
    %23 = vector.extract_strided_slice %22 {offsets = [0, 2], sizes = [128, 126], strides = [1, 1]} : vector<128x128xf32> to vector<128x126xf32>
    %24 = vector.extract_strided_slice %22 {offsets = [0, 0], sizes = [128, 2], strides = [1, 1]} : vector<128x128xf32> to vector<128x2xf32>
    %25 = tpu.concatenate %23, %24 in 1 : vector<128x126xf32>, vector<128x2xf32> -> vector<128x128xf32>
    %c2_i32 = arith.constant 2 : i32
    %26 = vector.broadcast %c2_i32 : i32 to vector<128x128xi32>
    %27 = arith.andi %14, %26 : vector<128x128xi32>
    %c0_i32_10 = arith.constant 0 : i32
    %28 = vector.broadcast %c0_i32_10 : i32 to vector<128x128xi32>
    %29 = arith.cmpi ne, %27, %28 : vector<128x128xi32>
    %30 = arith.select %29, %25, %22 : vector<128x128xi1>, vector<128x128xf32>
    %31 = vector.extract_strided_slice %30 {offsets = [0, 4], sizes = [128, 124], strides = [1, 1]} : vector<128x128xf32> to vector<128x124xf32>
    %32 = vector.extract_strided_slice %30 {offsets = [0, 0], sizes = [128, 4], strides = [1, 1]} : vector<128x128xf32> to vector<128x4xf32>
    %33 = tpu.concatenate %31, %32 in 1 : vector<128x124xf32>, vector<128x4xf32> -> vector<128x128xf32>
    %c4_i32 = arith.constant 4 : i32
    %34 = vector.broadcast %c4_i32 : i32 to vector<128x128xi32>
    %35 = arith.andi %14, %34 : vector<128x128xi32>
    %c0_i32_11 = arith.constant 0 : i32
    %36 = vector.broadcast %c0_i32_11 : i32 to vector<128x128xi32>
    %37 = arith.cmpi ne, %35, %36 : vector<128x128xi32>
    %38 = arith.select %37, %33, %30 : vector<128x128xi1>, vector<128x128xf32>
    %39 = vector.extract_strided_slice %38 {offsets = [0, 8], sizes = [128, 120], strides = [1, 1]} : vector<128x128xf32> to vector<128x120xf32>
    %40 = vector.extract_strided_slice %38 {offsets = [0, 0], sizes = [128, 8], strides = [1, 1]} : vector<128x128xf32> to vector<128x8xf32>
    %41 = tpu.concatenate %39, %40 in 1 : vector<128x120xf32>, vector<128x8xf32> -> vector<128x128xf32>
    %c8_i32 = arith.constant 8 : i32
    %42 = vector.broadcast %c8_i32 : i32 to vector<128x128xi32>
    %43 = arith.andi %14, %42 : vector<128x128xi32>
    %c0_i32_12 = arith.constant 0 : i32
    %44 = vector.broadcast %c0_i32_12 : i32 to vector<128x128xi32>
    %45 = arith.cmpi ne, %43, %44 : vector<128x128xi32>
    %46 = arith.select %45, %41, %38 : vector<128x128xi1>, vector<128x128xf32>
    %47 = vector.extract_strided_slice %46 {offsets = [0, 16], sizes = [128, 112], strides = [1, 1]} : vector<128x128xf32> to vector<128x112xf32>
    %48 = vector.extract_strided_slice %46 {offsets = [0, 0], sizes = [128, 16], strides = [1, 1]} : vector<128x128xf32> to vector<128x16xf32>
    %49 = tpu.concatenate %47, %48 in 1 : vector<128x112xf32>, vector<128x16xf32> -> vector<128x128xf32>
    %c16_i32 = arith.constant 16 : i32
    %50 = vector.broadcast %c16_i32 : i32 to vector<128x128xi32>
    %51 = arith.andi %14, %50 : vector<128x128xi32>
    %c0_i32_13 = arith.constant 0 : i32
    %52 = vector.broadcast %c0_i32_13 : i32 to vector<128x128xi32>
    %53 = arith.cmpi ne, %51, %52 : vector<128x128xi32>
    %54 = arith.select %53, %49, %46 : vector<128x128xi1>, vector<128x128xf32>
    %55 = vector.extract_strided_slice %54 {offsets = [0, 32], sizes = [128, 96], strides = [1, 1]} : vector<128x128xf32> to vector<128x96xf32>
    %56 = vector.extract_strided_slice %54 {offsets = [0, 0], sizes = [128, 32], strides = [1, 1]} : vector<128x128xf32> to vector<128x32xf32>
    %57 = tpu.concatenate %55, %56 in 1 : vector<128x96xf32>, vector<128x32xf32> -> vector<128x128xf32>
    %c32_i32 = arith.constant 32 : i32
    %58 = vector.broadcast %c32_i32 : i32 to vector<128x128xi32>
    %59 = arith.andi %14, %58 : vector<128x128xi32>
    %c0_i32_14 = arith.constant 0 : i32
    %60 = vector.broadcast %c0_i32_14 : i32 to vector<128x128xi32>
    %61 = arith.cmpi ne, %59, %60 : vector<128x128xi32>
    %62 = arith.select %61, %57, %54 : vector<128x128xi1>, vector<128x128xf32>
    %63 = vector.extract_strided_slice %62 {offsets = [0, 64], sizes = [128, 64], strides = [1, 1]} : vector<128x128xf32> to vector<128x64xf32>
    %64 = vector.extract_strided_slice %62 {offsets = [0, 0], sizes = [128, 64], strides = [1, 1]} : vector<128x128xf32> to vector<128x64xf32>
    %65 = tpu.concatenate %63, %64 in 1 : vector<128x64xf32>, vector<128x64xf32> -> vector<128x128xf32>
    %c64_i32 = arith.constant 64 : i32
    %66 = vector.broadcast %c64_i32 : i32 to vector<128x128xi32>
    %67 = arith.andi %14, %66 : vector<128x128xi32>
    %c0_i32_15 = arith.constant 0 : i32
    %68 = vector.broadcast %c0_i32_15 : i32 to vector<128x128xi32>
    %69 = arith.cmpi ne, %67, %68 : vector<128x128xi32>
    %70 = arith.select %69, %65, %62 : vector<128x128xi1>, vector<128x128xf32>
    %cst_16 = arith.constant dense<0.000000e+00> : vector<128xf32>
    %71 = vector.multi_reduction <add>, %70, %cst_16 [0] : vector<128x128xf32> to vector<128xf32>
    %72 = vector.shape_cast %71 : vector<128xf32> to vector<1x128xf32>
    %cst_17 = arith.constant 3.125000e-02 : f32
    %73 = vector.broadcast %cst_17 : f32 to vector<1x128xf32>
    %74 = arith.mulf %72, %73 : vector<1x128xf32>
    %c0_18 = arith.constant 0 : index
    %c0_19 = arith.constant 0 : index
    %c0_20 = arith.constant 0 : index
    %75 = vector.load %arg5[%c0_18, %c0_19, %c0_20] : memref<1x1x128xf32, #tpu.memory_space<vmem>>, vector<1x1x128xf32>
    %76 = vector.shape_cast %75 : vector<1x1x128xf32> to vector<1x128xf32>
    %77 = vector.shape_cast %74 : vector<1x128xf32> to vector<1x1x128xf32>
    tpu.vector_store %arg5[%c0_18, %c0_19, %c0_20], %77 {strides = array<i32>} : memref<1x1x128xf32, #tpu.memory_space<vmem>>, vector<1x1x128xf32>,
    return
  }
  func.func @transform_0(%arg0: i32) -> (i32, i32, i32) {
    %c0_i32 = arith.constant 0 : i32
    %c0_i32_0 = arith.constant 0 : i32
    %c0_i32_1 = arith.constant 0 : i32
    return %arg0, %c0_i32, %c0_i32_0 : i32, i32, i32
  }
  func.func @transform_1(%arg0: i32) -> (i32, i32) {
    %c0_i32 = arith.constant 0 : i32
    %c0_i32_0 = arith.constant 0 : i32
    %c0_i32_1 = arith.constant 0 : i32
    return %c0_i32, %c0_i32_0 : i32, i32
  }
  func.func @transform_2(%arg0: i32) -> (i32, i32) {
    %c0_i32 = arith.constant 0 : i32
    %c0_i32_0 = arith.constant 0 : i32
    %c0_i32_1 = arith.constant 0 : i32
    return %c0_i32, %c0_i32_0 : i32, i32
  }
  func.func @transform_3(%arg0: i32) -> (i32, i32, i32) {
    %c0_i32 = arith.constant 0 : i32
    %c0_i32_0 = arith.constant 0 : i32
    %c0_i32_1 = arith.constant 0 : i32
    return %arg0, %c0_i32, %c0_i32_0 : i32, i32, i32
  }
  func.func @transform_4(%arg0: i32) -> (i32, i32, i32) {
    %c0_i32 = arith.constant 0 : i32
    %c0_i32_0 = arith.constant 0 : i32
    %c0_i32_1 = arith.constant 0 : i32
    return %arg0, %c0_i32, %c0_i32_0 : i32, i32, i32
  }
}

</mosaic_0001>

<llo_original>
// kernel: tpu_custom_call.1
$region0: #{tpu_custom_call.1}
  #allocation0 [shape = 'u32[]', space=smem, size = 0x4, offset = 0x4, fixed_abs, tag = 'smem constant byte address 0x4 - core index']
  #allocation1 [shape = 'u32[144,128]{1,0:T(1,128)}', space=vmem, size = 0x12000, scoped, tag = 'internal scratch']
  %s0 = inlined_call_operand.hbm [shape: f32[128,128], index: 0, kind: input, shape index: {}]
  %s1 = inlined_call_operand.hbm [shape: f32[128,128], index: 1, kind: output, shape index: {}]
  %s2 = sld [smem:[#allocation0]]
  $region18: #{tpu_custom_call.1} parent=0
    _
  %s4 = ssub.s32 1, %s2
  %s5 = scalar_select 0, %s4, %s2
  $region1: #{tpu_custom_call.1} parent=0
    #allocation2 [shape = 'u8[65536]{0}', space=vmem, size = 0x10000, scoped, tag = 'input window, operand 0, single buffered']
    #allocation3 [shape = 's32[1]{0}', space=sflag, size = 0x4, scoped, tag = 'scoped memory for tpu_custom_call.1']
    #allocation4 [shape = 's32[1]{0}', space=sflag, size = 0x4, scoped, tag = 'scoped memory for tpu_custom_call.1']
    #allocation5 [shape = 'u8[65536]{0}', space=vmem, size = 0x10000, scoped, tag = 'output window, operand 0, single buffered']
    %6 = vsyncpa [#allocation3], 0
    %7 = vsyncpa [#allocation4], 0
    // Predicated region
    $region2: #{tpu_custom_call.1} parent=1 // pred_check
      _
    $region3: #{tpu_custom_call.1} parent=1 // pred_check_branch
      %9 = sbr.rel (0) target = $region5
    $region4: #{tpu_custom_call.1} parent=1 // pred_region
      %s11 = ssub.s32 2048, 2048
      %12 = vsyncadd [#allocation3], %s11
      %s13 = sshll.u32 [#allocation2], 4
      %s14 = int_to_ptr.vmem [resolvable:$true] %s13
      %19 = dma.hbm_to_vmem [thread:$0]  %s0, 2048, %s14, [#allocation3], 128, 128, 8
    $region5: #{tpu_custom_call.1} parent=1 // pred_fallthru
      _
    // Predicated region
    $region6: #{tpu_custom_call.1} parent=1 // pred_check
      _
    $region7: #{tpu_custom_call.1} parent=1 // pred_check_branch
      %21 = sbr.rel (0) target = $region9
    $region8: #{tpu_custom_call.1} parent=1 // pred_region
      %22 = dma.done [#allocation3], 2048
    $region9: #{tpu_custom_call.1} parent=1 // pred_fallthru
      _
    %v23 = vld [vmem:[#allocation2] sm:$0xff]
    %v24 = vld [vmem:[#allocation2 + $0x8] sm:$0xff]
    %v25 = vld [vmem:[#allocation2 + $0x10] sm:$0xff]
    %v26 = vld [vmem:[#allocation2 + $0x18] sm:$0xff]
    %v27 = vld [vmem:[#allocation2 + $0x20] sm:$0xff]
    %v28 = vld [vmem:[#allocation2 + $0x28] sm:$0xff]
    %v29 = vld [vmem:[#allocation2 + $0x30] sm:$0xff]
    %v30 = vld [vmem:[#allocation2 + $0x38] sm:$0xff]
    %v31 = vld [vmem:[#allocation2 + $0x40] sm:$0xff]
    %v32 = vld [vmem:[#allocation2 + $0x48] sm:$0xff]
    %v33 = vld [vmem:[#allocation2 + $0x50] sm:$0xff]
    %v34 = vld [vmem:[#allocation2 + $0x58] sm:$0xff]
    %v35 = vld [vmem:[#allocation2 + $0x60] sm:$0xff]
    %v36 = vld [vmem:[#allocation2 + $0x68] sm:$0xff]
    %v37 = vld [vmem:[#allocation2 + $0x70] sm:$0xff]
    %v38 = vld [vmem:[#allocation2 + $0x78] sm:$0xff]
    %40 = vrot.lane.b32.xlu0 %v23, 256
    %v41 = vpop.permute.xlu0 %40
    %s43 = sor.u32 256, 8
    %44 = vrot.lane.b32.xlu0 %v24, %s43
    %v45 = vpop.permute.xlu0 %44
    %s47 = sor.u32 256, 16
    %48 = vrot.lane.b32.xlu0 %v25, %s47
    %v49 = vpop.permute.xlu0 %48
    %s51 = sor.u32 256, 24
    %52 = vrot.lane.b32.xlu0 %v26, %s51
    %v53 = vpop.permute.xlu0 %52
    %s55 = sor.u32 256, 32
    %56 = vrot.lane.b32.xlu0 %v27, %s55
    %v57 = vpop.permute.xlu0 %56
    %s59 = sor.u32 256, 40
    %60 = vrot.lane.b32.xlu0 %v28, %s59
    %v61 = vpop.permute.xlu0 %60
    %s63 = sor.u32 256, 48
    %64 = vrot.lane.b32.xlu0 %v29, %s63
    %v65 = vpop.permute.xlu0 %64
    %s67 = sor.u32 256, 56
    %68 = vrot.lane.b32.xlu0 %v30, %s67
    %v69 = vpop.permute.xlu0 %68
    %s71 = sor.u32 256, 64
    %72 = vrot.lane.b32.xlu0 %v31, %s71
    %v73 = vpop.permute.xlu0 %72
    %s75 = sor.u32 256, 72
    %76 = vrot.lane.b32.xlu0 %v32, %s75
    %v77 = vpop.permute.xlu0 %76
    %s79 = sor.u32 256, 80
    %80 = vrot.lane.b32.xlu0 %v33, %s79
    %v81 = vpop.permute.xlu0 %80
    %s83 = sor.u32 256, 88
    %84 = vrot.lane.b32.xlu0 %v34, %s83
    %v85 = vpop.permute.xlu0 %84
    %s87 = sor.u32 256, 96
    %88 = vrot.lane.b32.xlu0 %v35, %s87
    %v89 = vpop.permute.xlu0 %88
    %s91 = sor.u32 256, 104
    %92 = vrot.lane.b32.xlu0 %v36, %s91
    %v93 = vpop.permute.xlu0 %92
    %s95 = sor.u32 256, 112
    %96 = vrot.lane.b32.xlu0 %v37, %s95
    %v97 = vpop.permute.xlu0 %96
    %s99 = sor.u32 256, 120
    %100 = vrot.lane.b32.xlu0 %v38, %s99
    %v101 = vpop.permute.xlu0 %100
    %102 = vst [vmem:[#allocation5] sm:$0xff] %v41
    %103 = vst [vmem:[#allocation5 + $0x8] sm:$0xff] %v45
    %104 = vst [vmem:[#allocation5 + $0x10] sm:$0xff] %v49
    %105 = vst [vmem:[#allocation5 + $0x18] sm:$0xff] %v53
    %106 = vst [vmem:[#allocation5 + $0x20] sm:$0xff] %v57
    %107 = vst [vmem:[#allocation5 + $0x28] sm:$0xff] %v61
    %108 = vst [vmem:[#allocation5 + $0x30] sm:$0xff] %v65
    %109 = vst [vmem:[#allocation5 + $0x38] sm:$0xff] %v69
    %110 = vst [vmem:[#allocation5 + $0x40] sm:$0xff] %v73
    %111 = vst [vmem:[#allocation5 + $0x48] sm:$0xff] %v77
    %112 = vst [vmem:[#allocation5 + $0x50] sm:$0xff] %v81
    %113 = vst [vmem:[#allocation5 + $0x58] sm:$0xff] %v85
    %114 = vst [vmem:[#allocation5 + $0x60] sm:$0xff] %v89
    %115 = vst [vmem:[#allocation5 + $0x68] sm:$0xff] %v93
    %116 = vst [vmem:[#allocation5 + $0x70] sm:$0xff] %v97
    %117 = vst [vmem:[#allocation5 + $0x78] sm:$0xff] %v101
    // Predicated region
    $region10: #{tpu_custom_call.1} parent=1 // pred_check
      _
    $region11: #{tpu_custom_call.1} parent=1 // pred_check_branch
      %119 = sbr.rel (0) target = $region13
    $region12: #{tpu_custom_call.1} parent=1 // pred_region
      %s121 = ssub.s32 2048, 2048
      %122 = vsyncadd [#allocation4], %s121
      %s123 = sshll.u32 [#allocation5], 4
      %s124 = int_to_ptr.vmem [resolvable:$true] %s123
      %129 = dma.vmem_to_hbm [thread:$0]  %s124, 2048, %s1, [#allocation4], 128, 128, 8
    $region13: #{tpu_custom_call.1} parent=1 // pred_fallthru
      _
    // Predicated region
    $region14: #{tpu_custom_call.1} parent=1 // pred_check
      _
    $region15: #{tpu_custom_call.1} parent=1 // pred_check_branch
      %131 = sbr.rel (0) target = $region17
    $region16: #{tpu_custom_call.1} parent=1 // pred_region
      %132 = dma.done [#allocation4], 2048
    $region17: #{tpu_custom_call.1} parent=1 // pred_fallthru
      _
    %133 = vsyncpa [#allocation3], 1
    %134 = vsyncpa [#allocation4], 1

// kernel: tpu_custom_call.1
$region0: #{tpu_custom_call.1}
  #allocation0 [shape = 'u32[]', space=smem, size = 0x4, offset = 0x4, fixed_abs, tag = 'smem constant byte address 0x4 - core index']
  #allocation1 [shape = 'u32[144,128]{1,0:T(1,128)}', space=vmem, size = 0x12000, scoped, tag = 'internal scratch']
  %s0 = inlined_call_operand.vmem [shape: f32[2,128,32], index: 0, kind: input, shape index: {}]
  %s1 = inlined_call_operand.vmem [shape: f32[32,96], index: 1, kind: input, shape index: {}]
  %s2 = inlined_call_operand.vmem [shape: f32[1,96], index: 2, kind: input, shape index: {}]
  %s3 = inlined_call_operand.vmem [shape: f32[2,128,32], index: 3, kind: output, shape index: {0}]
  %s4 = inlined_call_operand.hbm [shape: f32[2,1,128], index: 4, kind: output, shape index: {1}]
  %5 = xla_tuple %s3, %s4
  %s6 = sld [smem:[#allocation0]]
  $region53: #{tpu_custom_call.1} parent=0
    _
  %s8 = ssub.s32 1, %s6
  %s9 = scalar_select 0, %s8, %s6
  $region1: #{tpu_custom_call.1} parent=0
    #allocation2 [shape = 'u8[1024]{0}', space=vmem, size = 0x400, scoped, tag = 'output window, operand 1']
    #allocation3 [shape = 's32[2]{0}', space=sflag, size = 0x8, scoped, tag = 'scoped memory for tpu_custom_call.1']
    %10 = vsyncpa [#allocation3], 0
    %s11 = scalar_lea.sflag [#allocation3], 1
    %12 = vsyncpa %s11, 0
    loop: start=0, step=1, limit=4
    $region2: #{tpu_custom_call.1} parent=1 // loop_pre_header
      _
    $region3: #{tpu_custom_call.1} parent=1 // loop_header
      %s14 = sphi 0, %s18
      %p15 = scmp.ge.s32.totalorder %s14, 4
      %s24 = sphi 0, %s26
      %s27 = sphi 0, %s24
      %s28 = sphi 0, %s27
      %s44 = sphi 0, %s28
      %s48 = sphi 0, %s48
      %s50 = sphi 0, %s48
      %s51 = sphi 0, %s50
      %s65 = sphi 0, %s51
      %s69 = sphi 0, %s69
      %s71 = sphi 0, %s69
      %s72 = sphi 0, %s71
      %s86 = sphi 0, %s72
      %s92 = sphi 0, %s94
      %s95 = sphi 0, %s92
      %s96 = sphi 0, %s95
      %s112 = sphi 0, %s96
      %s118 = sphi 0, %s120
      %s121 = sphi 0, %s118
      %s122 = sphi 0, %s121
      %s138 = sphi 0, %s122
    $region4: #{tpu_custom_call.1} parent=1 // loop_header_branch
      %17 = sbr.rel (%p15) target = $region8
    $region5: #{tpu_custom_call.1} parent=1 // loop_body
      %s19 = ssub.s32 %s14, 1
      %s20 = ssub.s32 %s14, 2
      %s21 = sadd.s32 %s14, 1
      %s22 = ssub.s32 %s14, %s21
      %p23 = scmp.eq.s32.totalorder %s22, 0
      %s25 = sadd.s32 %s24, 1
      %s26 = scalar_select %p23, %s24, %s25
      %p29 = pneg %p23
      %p30 = scmp.eq.s32.totalorder %s14, 1
      %p31 = por %p29, %p30
      %p32 = scmp.ne.s32.totalorder %s24, %s27
      %p33 = scmp.eq.s32.totalorder %s14, 0
      %p34 = por %p32, %p33
      %p35 = scmp.ne.s32.totalorder %s24, %s27
      %p36 = scmp.eq.s32.totalorder %s19, 1
      %p37 = por %p35, %p36
      %p38 = scmp.ne.s32.totalorder %s27, %s28
      %p39 = scmp.eq.s32.totalorder %s19, 0
      %p40 = por %p38, %p39
      %p41 = scmp.ne.s32.totalorder %s27, %s28
      %p42 = scmp.eq.s32.totalorder %s20, 1
      %p43 = por %p41, %p42
      %p45 = scmp.ne.s32.totalorder %s28, %s44
      %p46 = scmp.eq.s32.totalorder %s20, 0
      %p47 = por %p45, %p46
      %s49 = sadd.s32 %s48, 1
      %p52 = scmp.eq.s32.totalorder %s14, 1
      %p53 = scmp.ne.s32.totalorder %s48, %s50
      %p54 = scmp.eq.s32.totalorder %s14, 0
      %p55 = por %p53, %p54
      %p56 = scmp.ne.s32.totalorder %s48, %s50
      %p57 = scmp.eq.s32.totalorder %s19, 1
      %p58 = por %p56, %p57
      %p59 = scmp.ne.s32.totalorder %s50, %s51
      %p60 = scmp.eq.s32.totalorder %s19, 0
      %p61 = por %p59, %p60
      %p62 = scmp.ne.s32.totalorder %s50, %s51
      %p63 = scmp.eq.s32.totalorder %s20, 1
      %p64 = por %p62, %p63
      %p66 = scmp.ne.s32.totalorder %s51, %s65
      %p67 = scmp.eq.s32.totalorder %s20, 0
      %p68 = por %p66, %p67
      %s70 = sadd.s32 %s69, 1
      %p73 = scmp.eq.s32.totalorder %s14, 1
      %p74 = scmp.ne.s32.totalorder %s69, %s71
      %p75 = scmp.eq.s32.totalorder %s14, 0
      %p76 = por %p74, %p75
      %p77 = scmp.ne.s32.totalorder %s69, %s71
      %p78 = scmp.eq.s32.totalorder %s19, 1
      %p79 = por %p77, %p78
      %p80 = scmp.ne.s32.totalorder %s71, %s72
      %p81 = scmp.eq.s32.totalorder %s19, 0
      %p82 = por %p80, %p81
      %p83 = scmp.ne.s32.totalorder %s71, %s72
      %p84 = scmp.eq.s32.totalorder %s20, 1
      %p85 = por %p83, %p84
      %p87 = scmp.ne.s32.totalorder %s72, %s86
      %p88 = scmp.eq.s32.totalorder %s20, 0
      %p89 = por %p87, %p88
      %s90 = ssub.s32 %s14, %s21
      %p91 = scmp.eq.s32.totalorder %s90, 0
      %s93 = sadd.s32 %s92, 1
      %s94 = scalar_select %p91, %s92, %s93
      %p97 = pneg %p91
      %p98 = scmp.eq.s32.totalorder %s14, 1
      %p99 = por %p97, %p98
      %p100 = scmp.ne.s32.totalorder %s92, %s95
      %p101 = scmp.eq.s32.totalorder %s14, 0
      %p102 = por %p100, %p101
      %p103 = scmp.ne.s32.totalorder %s92, %s95
      %p104 = scmp.eq.s32.totalorder %s19, 1
      %p105 = por %p103, %p104
      %p106 = scmp.ne.s32.totalorder %s95, %s96
      %p107 = scmp.eq.s32.totalorder %s19, 0
      %p108 = por %p106, %p107
      %p109 = scmp.ne.s32.totalorder %s95, %s96
      %p110 = scmp.eq.s32.totalorder %s20, 1
      %p111 = por %p109, %p110
      %p113 = scmp.ne.s32.totalorder %s96, %s112
      %p114 = scmp.eq.s32.totalorder %s20, 0
      %p115 = por %p113, %p114
      %s116 = ssub.s32 %s14, %s21
      %p117 = scmp.eq.s32.totalorder %s116, 0
      %s119 = sadd.s32 %s118, 1
      %s120 = scalar_select %p117, %s118, %s119
      %p123 = pneg %p117
      %p124 = scmp.eq.s32.totalorder %s14, 1
      %p125 = por %p123, %p124
      %p126 = scmp.ne.s32.totalorder %s118, %s121
      %p127 = scmp.eq.s32.totalorder %s14, 0
      %p128 = por %p126, %p127
      %p129 = scmp.ne.s32.totalorder %s118, %s121
      %p130 = scmp.eq.s32.totalorder %s19, 1
      %p131 = por %p129, %p130
      %p132 = scmp.ne.s32.totalorder %s121, %s122
      %p133 = scmp.eq.s32.totalorder %s19, 0
      %p134 = por %p132, %p133
      %p135 = scmp.ne.s32.totalorder %s121, %s122
      %p136 = scmp.eq.s32.totalorder %s20, 1
      %p137 = por %p135, %p136
      %p139 = scmp.ne.s32.totalorder %s122, %s138
      %p140 = scmp.eq.s32.totalorder %s20, 0
      %p141 = por %p139, %p140
      %p142 = scmp.le.s32.totalorder 1, %s14
      %p143 = scmp.lt.s32.totalorder %s14, 3
      %p144 = pnand %p142, %p143
      %p145 = pneg %p144
      // Predicated region
      $region9: #{tpu_custom_call.1} parent=5 // pred_check
        _
      $region10: #{tpu_custom_call.1} parent=5 // pred_check_branch
        %147 = sbr.rel (%p144) target = $region12
      $region11: #{tpu_custom_call.1} parent=5 // pred_region
        %s148 = ssub.s32 %s14, 1
        // Predicated region
        $region13: #{tpu_custom_call.1} parent=11 // pred_check
          %p149 = pneg %p61
        $region14: #{tpu_custom_call.1} parent=11 // pred_check_branch
          %151 = sbr.rel (%p149) target = $region16
        $region15: #{tpu_custom_call.1} parent=11 // pred_region
          _
        $region16: #{tpu_custom_call.1} parent=11 // pred_fallthru
          _
        // Predicated region
        $region17: #{tpu_custom_call.1} parent=11 // pred_check
          %p152 = pneg %p82
        $region18: #{tpu_custom_call.1} parent=11 // pred_check_branch
          %154 = sbr.rel (%p152) target = $region20
        $region19: #{tpu_custom_call.1} parent=11 // pred_region
          _
        $region20: #{tpu_custom_call.1} parent=11 // pred_fallthru
          _
      $region12: #{tpu_custom_call.1} parent=5 // pred_fallthru
        _
      %p155 = scmp.lt.s32.totalorder %s14, 2
      // Predicated region
      $region21: #{tpu_custom_call.1} parent=5 // pred_check
        %p156 = pneg %p155
      $region22: #{tpu_custom_call.1} parent=5 // pred_check_branch
        %158 = sbr.rel (%p156) target = $region24
      $region23: #{tpu_custom_call.1} parent=5 // pred_region
        // Predicated region
        $region25: #{tpu_custom_call.1} parent=23 // pred_check
          %p159 = pneg %p34
        $region26: #{tpu_custom_call.1} parent=23 // pred_check_branch
          %161 = sbr.rel (%p159) target = $region28
        $region27: #{tpu_custom_call.1} parent=23 // pred_region
          %p162 = scmp.lt.s32.totalorder %s14, 1
          %s163 = scalar_select %p162, %s14, 1
          %s164 = smul.addr %s163, 16
          %s165 = smul.addr %s164, 8
          %s166 = scalar_lea.vmem %s0, %s165
        $region28: #{tpu_custom_call.1} parent=23 // pred_fallthru
          _
      $region24: #{tpu_custom_call.1} parent=5 // pred_fallthru
        _
      %p167 = scmp.le.s32.totalorder 1, %s14
      %p168 = scmp.lt.s32.totalorder %s14, 3
      %p169 = pnand %p167, %p168
      %p170 = pneg %p169
      // Predicated region
      $region29: #{tpu_custom_call.1} parent=5 // pred_check
        _
      $region30: #{tpu_custom_call.1} parent=5 // pred_check_branch
        %172 = sbr.rel (%p169) target = $region32
      $region31: #{tpu_custom_call.1} parent=5 // pred_region
        %s173 = ssub.s32 %s14, 1
        %p174 = scmp.lt.s32.totalorder %s19, 1
        %s175 = scalar_select %p174, %s19, 1
        %s176 = smul.addr %s175, 16
        %s177 = smul.addr %s176, 8
        %s178 = scalar_lea.vmem %s0, %s177
        %p179 = pneg %p40
        %p180 = pneg %p37
        %p181 = pneg %p61
        %p182 = pneg %p58
        %p183 = pneg %p82
        %p184 = pneg %p79
        %p185 = pneg %p108
        %p186 = pneg %p105
        %p187 = scmp.lt.s32.totalorder %s19, 1
        %s188 = scalar_select %p187, %s19, 1
        %s189 = smul.addr %s188, 16
        %s190 = smul.addr %s189, 8
        %s191 = scalar_lea.vmem %s3, %s190
        %p192 = pneg %p134
        %p193 = pneg %p131
        %s194 = sand.u32 %s121, 1
        %s195 = scalar_lea.sflag [#allocation3], %s194
        %s196 = sand.u32 %s121, 1
        %s197 = scalar_lea.vmem [#allocation2], %s196
        %p198 = scmp.lt.s32.totalorder %s19, 1
        %s199 = scalar_select %p198, %s19, 1
        %s200 = smul.addr %s199, 16
        %s201 = smul.addr %s200, 8
        %s202 = scalar_lea.vmem %s0, %s201
        %p203 = scmp.lt.s32.totalorder %s19, 1
        %s204 = scalar_select %p203, %s19, 1
        %s205 = smul.addr %s204, 16
        %s206 = smul.addr %s205, 8
        %s207 = scalar_lea.vmem %s3, %s206
        %v208 = vld [vmem:[%s202] sm:$0xff]
        %v209 = vld [vmem:[%s202 + $0x8] sm:$0xff]
        %v210 = vld [vmem:[%s202 + $0x10] sm:$0xff]
        %v211 = vld [vmem:[%s202 + $0x18] sm:$0xff]
        %v212 = vld [vmem:[%s202 + $0x20] sm:$0xff]
        %v213 = vld [vmem:[%s202 + $0x28] sm:$0xff]
        %v214 = vld [vmem:[%s202 + $0x30] sm:$0xff]
        %v215 = vld [vmem:[%s202 + $0x38] sm:$0xff]
        %v216 = vld [vmem:[%s202 + $0x40] sm:$0xff]
        %v217 = vld [vmem:[%s202 + $0x48] sm:$0xff]
        %v218 = vld [vmem:[%s202 + $0x50] sm:$0xff]
        %v219 = vld [vmem:[%s202 + $0x58] sm:$0xff]
        %v220 = vld [vmem:[%s202 + $0x60] sm:$0xff]
        %v221 = vld [vmem:[%s202 + $0x68] sm:$0xff]
        %v222 = vld [vmem:[%s202 + $0x70] sm:$0xff]
        %v223 = vld [vmem:[%s202 + $0x78] sm:$0xff]
        %v224 = vld [vmem:[%s1] sm:$0xff]
        %v225 = vld [vmem:[%s1 + $0x8] sm:$0xff]
        %v226 = vld [vmem:[%s1 + $0x10] sm:$0xff]
        %v227 = vld [vmem:[%s1 + $0x18] sm:$0xff]
        %v228 = vld [vmem:[%s2] sm:$0x1]
        %v230 = vlaneseq
        %v231 = vshrl.u32 %v230, 7
        %v232 = vsub.s32 0, %v231
        %v233 = vrot.slane %v228, %v232
        %vm235 = vcmask 261120
        %v237 = vsel %vm235, %v208, 0
        %v240 = vsel %vm235, %v209, 0
        %v243 = vsel %vm235, %v210, 0
        %v246 = vsel %vm235, %v211, 0
        %v249 = vsel %vm235, %v212, 0
        %v252 = vsel %vm235, %v213, 0
        %v255 = vsel %vm235, %v214, 0
        %v258 = vsel %vm235, %v215, 0
        %v261 = vsel %vm235, %v216, 0
        %v264 = vsel %vm235, %v217, 0
        %v267 = vsel %vm235, %v218, 0
        %v270 = vsel %vm235, %v219, 0
        %v273 = vsel %vm235, %v220, 0
        %v276 = vsel %vm235, %v221, 0
        %v279 = vsel %vm235, %v222, 0
        %v282 = vsel %vm235, %v223, 0
        %284 = vmatprep.subr.mxu0 0.0
        %285 = vmatpush1.msra.mxu0 0.0
        %286 = vmatprep.subr.mxu0 0.0
        %287 = vmatpush1.msra.mxu0 0.0
        %288 = vmatprep.subr.mxu0 0.0
        %289 = vmatpush1.msra.mxu0 0.0
        %290 = vmatprep.subr.mxu0 0.0
        %291 = vmatpush1.msra.mxu0 0.0
        %292 = vmatprep.subr.mxu0 0.0
        %293 = vmatpush1.msra.mxu0 0.0
        %294 = vmatprep.subr.mxu0 0.0
        %295 = vmatpush1.msra.mxu0 0.0
        %296 = vmatprep.subr.mxu0 0.0
        %297 = vmatpush1.msra.mxu0 0.0
        %298 = vmatprep.subr.mxu0 0.0
        %299 = vmatpush1.msra.mxu0 0.0
        %300 = vmatprep.subr.mxu0 0.0
        %301 = vmatpush1.msra.mxu0 0.0
        %302 = vmatprep.subr.mxu0 0.0
        %303 = vmatpush1.msra.mxu0 0.0
        %304 = vmatprep.subr.mxu0 0.0
        %305 = vmatpush1.msra.mxu0 0.0
        %306 = vmatprep.subr.mxu0 0.0
        %307 = vmatpush1.msra.mxu0 0.0
        %308 = vmatprep.subr.mxu0 0.0
        %309 = vmatpush1.msra.mxu0 %v227
        %310 = vmatprep.subr.mxu0 0.0
        %311 = vmatpush1.msra.mxu0 %v226
        %312 = vmatprep.subr.mxu0 0.0
        %313 = vmatpush1.msra.mxu0 %v225
        %314 = vmatprep.subr.mxu0 0.0
        %315 = vmatpush1.msra.mxu0 %v224
        %316 = vmatprep.subr.mxu0 0.0
        %317 = vmatpush2.msra.mxu0 0.0
        %318 = vmatprep.subr.mxu0 0.0
        %319 = vmatpush2.msra.mxu0 0.0
        %320 = vmatprep.subr.mxu0 0.0
        %321 = vmatpush2.msra.mxu0 0.0
        %322 = vmatprep.subr.mxu0 0.0
        %323 = vmatpush2.msra.mxu0 0.0
        %324 = vmatprep.subr.mxu0 0.0
        %325 = vmatpush2.msra.mxu0 0.0
        %326 = vmatprep.subr.mxu0 0.0
        %327 = vmatpush2.msra.mxu0 0.0
        %328 = vmatprep.subr.mxu0 0.0
        %329 = vmatpush2.msra.mxu0 0.0
        %330 = vmatprep.subr.mxu0 0.0
        %331 = vmatpush2.msra.mxu0 0.0
        %332 = vmatprep.subr.mxu0 0.0
        %333 = vmatpush2.msra.mxu0 0.0
        %334 = vmatprep.subr.mxu0 0.0
        %335 = vmatpush2.msra.mxu0 0.0
        %336 = vmatprep.subr.mxu0 0.0
        %337 = vmatpush2.msra.mxu0 0.0
        %338 = vmatprep.subr.mxu0 0.0
        %339 = vmatpush2.msra.mxu0 0.0
        %340 = vmatprep.subr.mxu0 0.0
        %341 = vmatpush2.msra.mxu0 0.0
        %342 = vmatprep.subr.mxu0 0.0
        %343 = vmatpush2.msra.mxu0 0.0
        %344 = vmatprep.subr.mxu0 0.0
        %345 = vmatpush2.msra.mxu0 0.0
        %346 = vmatprep.subr.mxu0 0.0
        %347 = vmatpush2.msra.mxu0 0.0
        %348 = vmatprep.mubr.f32.mxu0 0.0
        %349 = vmatmul.mubr.f32.gmra.mxu0 %v237
        %v350 = vpop.f32.mrf.mxu0
        %v351 = vadd.f32 %v233, %v350
        %v352 = vpop.f32.mrf.mxu0
        %353 = vmatprep.mubr.f32.mxu0 0.0
        %354 = vmatmul.mubr.f32.gmra.mxu0 %v240
        %v355 = vpop.f32.mrf.mxu0
        %v356 = vadd.f32 %v233, %v355
        %v357 = vpop.f32.mrf.mxu0
        %358 = vmatprep.mubr.f32.mxu0 0.0
        %359 = vmatmul.mubr.f32.gmra.mxu0 %v243
        %v360 = vpop.f32.mrf.mxu0
        %v361 = vadd.f32 %v233, %v360
        %v362 = vpop.f32.mrf.mxu0
        %363 = vmatprep.mubr.f32.mxu0 0.0
        %364 = vmatmul.mubr.f32.gmra.mxu0 %v246
        %v365 = vpop.f32.mrf.mxu0
        %v366 = vadd.f32 %v233, %v365
        %v367 = vpop.f32.mrf.mxu0
        %368 = vmatprep.mubr.f32.mxu0 0.0
        %369 = vmatmul.mubr.f32.gmra.mxu0 %v249
        %v370 = vpop.f32.mrf.mxu0
        %v371 = vadd.f32 %v233, %v370
        %v372 = vpop.f32.mrf.mxu0
        %373 = vmatprep.mubr.f32.mxu0 0.0
        %374 = vmatmul.mubr.f32.gmra.mxu0 %v252
        %v375 = vpop.f32.mrf.mxu0
        %v376 = vadd.f32 %v233, %v375
        %v377 = vpop.f32.mrf.mxu0
        %378 = vmatprep.mubr.f32.mxu0 0.0
        %379 = vmatmul.mubr.f32.gmra.mxu0 %v255
        %v380 = vpop.f32.mrf.mxu0
        %v381 = vadd.f32 %v233, %v380
        %v382 = vpop.f32.mrf.mxu0
        %383 = vmatprep.mubr.f32.mxu0 0.0
        %384 = vmatmul.mubr.f32.gmra.mxu0 %v258
        %v385 = vpop.f32.mrf.mxu0
        %v386 = vadd.f32 %v233, %v385
        %v387 = vpop.f32.mrf.mxu0
        %388 = vmatprep.mubr.f32.mxu0 0.0
        %389 = vmatmul.mubr.f32.gmra.mxu0 %v261
        %v390 = vpop.f32.mrf.mxu0
        %v391 = vadd.f32 %v233, %v390
        %v392 = vpop.f32.mrf.mxu0
        %393 = vmatprep.mubr.f32.mxu0 0.0
        %394 = vmatmul.mubr.f32.gmra.mxu0 %v264
        %v395 = vpop.f32.mrf.mxu0
        %v396 = vadd.f32 %v233, %v395
        %v397 = vpop.f32.mrf.mxu0
        %398 = vmatprep.mubr.f32.mxu0 0.0
        %399 = vmatmul.mubr.f32.gmra.mxu0 %v267
        %v400 = vpop.f32.mrf.mxu0
        %v401 = vadd.f32 %v233, %v400
        %v402 = vpop.f32.mrf.mxu0
        %403 = vmatprep.mubr.f32.mxu0 0.0
        %404 = vmatmul.mubr.f32.gmra.mxu0 %v270
        %v405 = vpop.f32.mrf.mxu0
        %v406 = vadd.f32 %v233, %v405
        %v407 = vpop.f32.mrf.mxu0
        %408 = vmatprep.mubr.f32.mxu0 0.0
        %409 = vmatmul.mubr.f32.gmra.mxu0 %v273
        %v410 = vpop.f32.mrf.mxu0
        %v411 = vadd.f32 %v233, %v410
        %v412 = vpop.f32.mrf.mxu0
        %413 = vmatprep.mubr.f32.mxu0 0.0
        %414 = vmatmul.mubr.f32.gmra.mxu0 %v276
        %v415 = vpop.f32.mrf.mxu0
        %v416 = vadd.f32 %v233, %v415
        %v417 = vpop.f32.mrf.mxu0
        %418 = vmatprep.mubr.f32.mxu0 0.0
        %419 = vmatmul.mubr.f32.gmra.mxu0 %v279
        %v420 = vpop.f32.mrf.mxu0
        %v421 = vadd.f32 %v233, %v420
        %v422 = vpop.f32.mrf.mxu0
        %423 = vmatprep.mubr.f32.mxu0 0.0
        %424 = vmatmul.mubr.f32.gmra.mxu0 %v282
        %v425 = vpop.f32.mrf.mxu0
        %v426 = vadd.f32 %v233, %v425
        %v427 = vpop.f32.mrf.mxu0
        %428 = vdwg.mxu0
        %445 = vrot.lane.b32.xlu0 %v351, 64
        %v446 = vpop.permute.xlu0 %445
        %447 = vrot.lane.b32.xlu0 %v356, 64
        %v448 = vpop.permute.xlu0 %447
        %449 = vrot.lane.b32.xlu0 %v361, 64
        %v450 = vpop.permute.xlu0 %449
        %451 = vrot.lane.b32.xlu0 %v366, 64
        %v452 = vpop.permute.xlu0 %451
        %453 = vrot.lane.b32.xlu0 %v371, 64
        %v454 = vpop.permute.xlu0 %453
        %455 = vrot.lane.b32.xlu0 %v376, 64
        %v456 = vpop.permute.xlu0 %455
        %457 = vrot.lane.b32.xlu0 %v381, 64
        %v458 = vpop.permute.xlu0 %457
        %459 = vrot.lane.b32.xlu0 %v386, 64
        %v460 = vpop.permute.xlu0 %459
        %461 = vrot.lane.b32.xlu0 %v391, 64
        %v462 = vpop.permute.xlu0 %461
        %463 = vrot.lane.b32.xlu0 %v396, 64
        %v464 = vpop.permute.xlu0 %463
        %465 = vrot.lane.b32.xlu0 %v401, 64
        %v466 = vpop.permute.xlu0 %465
        %467 = vrot.lane.b32.xlu0 %v406, 64
        %v468 = vpop.permute.xlu0 %467
        %469 = vrot.lane.b32.xlu0 %v411, 64
        %v470 = vpop.permute.xlu0 %469
        %471 = vrot.lane.b32.xlu0 %v416, 64
        %v472 = vpop.permute.xlu0 %471
        %473 = vrot.lane.b32.xlu0 %v421, 64
        %v474 = vpop.permute.xlu0 %473
        %475 = vrot.lane.b32.xlu0 %v426, 64
        %v476 = vpop.permute.xlu0 %475
        %493 = vst.msk [vmem:[%s207] sm:$0xff] %vm235, %v446
        %494 = vst.msk [vmem:[%s207 + $0x8] sm:$0xff] %vm235, %v448
        %495 = vst.msk [vmem:[%s207 + $0x10] sm:$0xff] %vm235, %v450
        %496 = vst.msk [vmem:[%s207 + $0x18] sm:$0xff] %vm235, %v452
        %497 = vst.msk [vmem:[%s207 + $0x20] sm:$0xff] %vm235, %v454
        %498 = vst.msk [vmem:[%s207 + $0x28] sm:$0xff] %vm235, %v456
        %499 = vst.msk [vmem:[%s207 + $0x30] sm:$0xff] %vm235, %v458
        %500 = vst.msk [vmem:[%s207 + $0x38] sm:$0xff] %vm235, %v460
        %501 = vst.msk [vmem:[%s207 + $0x40] sm:$0xff] %vm235, %v462
        %502 = vst.msk [vmem:[%s207 + $0x48] sm:$0xff] %vm235, %v464
        %503 = vst.msk [vmem:[%s207 + $0x50] sm:$0xff] %vm235, %v466
        %504 = vst.msk [vmem:[%s207 + $0x58] sm:$0xff] %vm235, %v468
        %505 = vst.msk [vmem:[%s207 + $0x60] sm:$0xff] %vm235, %v470
        %506 = vst.msk [vmem:[%s207 + $0x68] sm:$0xff] %vm235, %v472
        %507 = vst.msk [vmem:[%s207 + $0x70] sm:$0xff] %vm235, %v474
        %508 = vst.msk [vmem:[%s207 + $0x78] sm:$0xff] %vm235, %v476
        %509 = vrot.lane.b32.xlu0 %v351, 96
        %v510 = vpop.permute.xlu0 %509
        %511 = vrot.lane.b32.xlu0 %v356, 96
        %v512 = vpop.permute.xlu0 %511
        %513 = vrot.lane.b32.xlu0 %v361, 96
        %v514 = vpop.permute.xlu0 %513
        %515 = vrot.lane.b32.xlu0 %v366, 96
        %v516 = vpop.permute.xlu0 %515
        %517 = vrot.lane.b32.xlu0 %v371, 96
        %v518 = vpop.permute.xlu0 %517
        %519 = vrot.lane.b32.xlu0 %v376, 96
        %v520 = vpop.permute.xlu0 %519
        %521 = vrot.lane.b32.xlu0 %v381, 96
        %v522 = vpop.permute.xlu0 %521
        %523 = vrot.lane.b32.xlu0 %v386, 96
        %v524 = vpop.permute.xlu0 %523
        %525 = vrot.lane.b32.xlu0 %v391, 96
        %v526 = vpop.permute.xlu0 %525
        %527 = vrot.lane.b32.xlu0 %v396, 96
        %v528 = vpop.permute.xlu0 %527
        %529 = vrot.lane.b32.xlu0 %v401, 96
        %v530 = vpop.permute.xlu0 %529
        %531 = vrot.lane.b32.xlu0 %v406, 96
        %v532 = vpop.permute.xlu0 %531
        %533 = vrot.lane.b32.xlu0 %v411, 96
        %v534 = vpop.permute.xlu0 %533
        %535 = vrot.lane.b32.xlu0 %v416, 96
        %v536 = vpop.permute.xlu0 %535
        %537 = vrot.lane.b32.xlu0 %v421, 96
        %v538 = vpop.permute.xlu0 %537
        %539 = vrot.lane.b32.xlu0 %v426, 96
        %v540 = vpop.permute.xlu0 %539
        %v541 = vsel %vm235, %v510, 0
        %v543 = vsel %vm235, %v512, 0
        %v545 = vsel %vm235, %v514, 0
        %v547 = vsel %vm235, %v516, 0
        %v549 = vsel %vm235, %v518, 0
        %v551 = vsel %vm235, %v520, 0
        %v553 = vsel %vm235, %v522, 0
        %v555 = vsel %vm235, %v524, 0
        %v557 = vsel %vm235, %v526, 0
        %v559 = vsel %vm235, %v528, 0
        %v561 = vsel %vm235, %v530, 0
        %v563 = vsel %vm235, %v532, 0
        %v565 = vsel %vm235, %v534, 0
        %v567 = vsel %vm235, %v536, 0
        %v569 = vsel %vm235, %v538, 0
        %v571 = vsel %vm235, %v540, 0
        %v573 = vsel %vm235, %v351, 0
        %v575 = vsel %vm235, %v356, 0
        %v577 = vsel %vm235, %v361, 0
        %v579 = vsel %vm235, %v366, 0
        %v581 = vsel %vm235, %v371, 0
        %v583 = vsel %vm235, %v376, 0
        %v585 = vsel %vm235, %v381, 0
        %v587 = vsel %vm235, %v386, 0
        %v589 = vsel %vm235, %v391, 0
        %v591 = vsel %vm235, %v396, 0
        %v593 = vsel %vm235, %v401, 0
        %v595 = vsel %vm235, %v406, 0
        %v597 = vsel %vm235, %v411, 0
        %v599 = vsel %vm235, %v416, 0
        %v601 = vsel %vm235, %v421, 0
        %v603 = vsel %vm235, %v426, 0
        %605 = vmatprep.subr.mxu0 0.0
        %606 = vmatpush1.xpose.msra.mxu0 %v603
        %607 = vmatprep.subr.mxu0 0.0
        %608 = vmatpush1.xpose.msra.mxu0 %v601
        %609 = vmatprep.subr.mxu0 0.0
        %610 = vmatpush1.xpose.msra.mxu0 %v599
        %611 = vmatprep.subr.mxu0 0.0
        %612 = vmatpush1.xpose.msra.mxu0 %v597
        %613 = vmatprep.subr.mxu0 0.0
        %614 = vmatpush1.xpose.msra.mxu0 %v595
        %615 = vmatprep.subr.mxu0 0.0
        %616 = vmatpush1.xpose.msra.mxu0 %v593
        %617 = vmatprep.subr.mxu0 0.0
        %618 = vmatpush1.xpose.msra.mxu0 %v591
        %619 = vmatprep.subr.mxu0 0.0
        %620 = vmatpush1.xpose.msra.mxu0 %v589
        %621 = vmatprep.subr.mxu0 0.0
        %622 = vmatpush1.xpose.msra.mxu0 %v587
        %623 = vmatprep.subr.mxu0 0.0
        %624 = vmatpush1.xpose.msra.mxu0 %v585
        %625 = vmatprep.subr.mxu0 0.0
        %626 = vmatpush1.xpose.msra.mxu0 %v583
        %627 = vmatprep.subr.mxu0 0.0
        %628 = vmatpush1.xpose.msra.mxu0 %v581
        %629 = vmatprep.subr.mxu0 0.0
        %630 = vmatpush1.xpose.msra.mxu0 %v579
        %631 = vmatprep.subr.mxu0 0.0
        %632 = vmatpush1.xpose.msra.mxu0 %v577
        %633 = vmatprep.subr.mxu0 0.0
        %634 = vmatpush1.xpose.msra.mxu0 %v575
        %635 = vmatprep.subr.mxu0 0.0
        %636 = vmatpush1.xpose.msra.mxu0 %v573
        %637 = vmatprep.subr.mxu0 0.0
        %638 = vmatpush2.xpose.msra.mxu0 0.0
        %639 = vmatprep.subr.mxu0 0.0
        %640 = vmatpush2.xpose.msra.mxu0 0.0
        %641 = vmatprep.subr.mxu0 0.0
        %642 = vmatpush2.xpose.msra.mxu0 0.0
        %643 = vmatprep.subr.mxu0 0.0
        %644 = vmatpush2.xpose.msra.mxu0 0.0
        %645 = vmatprep.subr.mxu0 0.0
        %646 = vmatpush2.xpose.msra.mxu0 0.0
        %647 = vmatprep.subr.mxu0 0.0
        %648 = vmatpush2.xpose.msra.mxu0 0.0
        %649 = vmatprep.subr.mxu0 0.0
        %650 = vmatpush2.xpose.msra.mxu0 0.0
        %651 = vmatprep.subr.mxu0 0.0
        %652 = vmatpush2.xpose.msra.mxu0 0.0
        %653 = vmatprep.subr.mxu0 0.0
        %654 = vmatpush2.xpose.msra.mxu0 0.0
        %655 = vmatprep.subr.mxu0 0.0
        %656 = vmatpush2.xpose.msra.mxu0 0.0
        %657 = vmatprep.subr.mxu0 0.0
        %658 = vmatpush2.xpose.msra.mxu0 0.0
        %659 = vmatprep.subr.mxu0 0.0
        %660 = vmatpush2.xpose.msra.mxu0 0.0
        %661 = vmatprep.subr.mxu0 0.0
        %662 = vmatpush2.xpose.msra.mxu0 0.0
        %663 = vmatprep.subr.mxu0 0.0
        %664 = vmatpush2.xpose.msra.mxu0 0.0
        %665 = vmatprep.subr.mxu0 0.0
        %666 = vmatpush2.xpose.msra.mxu0 0.0
        %667 = vmatprep.subr.mxu0 0.0
        %668 = vmatpush2.xpose.msra.mxu0 0.0
        %669 = vmatprep.mubr.f32.mxu0 0.0
        %670 = vmatmul.mubr.f32.gmra.mxu0 %v541
        %v671 = vpop.f32.mrf.mxu0
        %v672 = vadd.f32 0.0, %v671
        %v673 = vpop.f32.mrf.mxu0
        %674 = vmatprep.mubr.f32.mxu0 0.0
        %675 = vmatmul.mubr.f32.gmra.mxu0 %v543
        %v676 = vpop.f32.mrf.mxu0
        %v677 = vadd.f32 0.0, %v676
        %v678 = vpop.f32.mrf.mxu0
        %679 = vmatprep.mubr.f32.mxu0 0.0
        %680 = vmatmul.mubr.f32.gmra.mxu0 %v545
        %v681 = vpop.f32.mrf.mxu0
        %v682 = vadd.f32 0.0, %v681
        %v683 = vpop.f32.mrf.mxu0
        %684 = vmatprep.mubr.f32.mxu0 0.0
        %685 = vmatmul.mubr.f32.gmra.mxu0 %v547
        %v686 = vpop.f32.mrf.mxu0
        %v687 = vadd.f32 0.0, %v686
        %v688 = vpop.f32.mrf.mxu0
        %689 = vmatprep.mubr.f32.mxu0 0.0
        %690 = vmatmul.mubr.f32.gmra.mxu0 %v549
        %v691 = vpop.f32.mrf.mxu0
        %v692 = vadd.f32 0.0, %v691
        %v693 = vpop.f32.mrf.mxu0
        %694 = vmatprep.mubr.f32.mxu0 0.0
        %695 = vmatmul.mubr.f32.gmra.mxu0 %v551
        %v696 = vpop.f32.mrf.mxu0
        %v697 = vadd.f32 0.0, %v696
        %v698 = vpop.f32.mrf.mxu0
        %699 = vmatprep.mubr.f32.mxu0 0.0
        %700 = vmatmul.mubr.f32.gmra.mxu0 %v553
        %v701 = vpop.f32.mrf.mxu0
        %v702 = vadd.f32 0.0, %v701
        %v703 = vpop.f32.mrf.mxu0
        %704 = vmatprep.mubr.f32.mxu0 0.0
        %705 = vmatmul.mubr.f32.gmra.mxu0 %v555
        %v706 = vpop.f32.mrf.mxu0
        %v707 = vadd.f32 0.0, %v706
        %v708 = vpop.f32.mrf.mxu0
        %709 = vmatprep.mubr.f32.mxu0 0.0
        %710 = vmatmul.mubr.f32.gmra.mxu0 %v557
        %v711 = vpop.f32.mrf.mxu0
        %v712 = vadd.f32 0.0, %v711
        %v713 = vpop.f32.mrf.mxu0
        %714 = vmatprep.mubr.f32.mxu0 0.0
        %715 = vmatmul.mubr.f32.gmra.mxu0 %v559
        %v716 = vpop.f32.mrf.mxu0
        %v717 = vadd.f32 0.0, %v716
        %v718 = vpop.f32.mrf.mxu0
        %719 = vmatprep.mubr.f32.mxu0 0.0
        %720 = vmatmul.mubr.f32.gmra.mxu0 %v561
        %v721 = vpop.f32.mrf.mxu0
        %v722 = vadd.f32 0.0, %v721
        %v723 = vpop.f32.mrf.mxu0
        %724 = vmatprep.mubr.f32.mxu0 0.0
        %725 = vmatmul.mubr.f32.gmra.mxu0 %v563
        %v726 = vpop.f32.mrf.mxu0
        %v727 = vadd.f32 0.0, %v726
        %v728 = vpop.f32.mrf.mxu0
        %729 = vmatprep.mubr.f32.mxu0 0.0
        %730 = vmatmul.mubr.f32.gmra.mxu0 %v565
        %v731 = vpop.f32.mrf.mxu0
        %v732 = vadd.f32 0.0, %v731
        %v733 = vpop.f32.mrf.mxu0
        %734 = vmatprep.mubr.f32.mxu0 0.0
        %735 = vmatmul.mubr.f32.gmra.mxu0 %v567
        %v736 = vpop.f32.mrf.mxu0
        %v737 = vadd.f32 0.0, %v736
        %v738 = vpop.f32.mrf.mxu0
        %739 = vmatprep.mubr.f32.mxu0 0.0
        %740 = vmatmul.mubr.f32.gmra.mxu0 %v569
        %v741 = vpop.f32.mrf.mxu0
        %v742 = vadd.f32 0.0, %v741
        %v743 = vpop.f32.mrf.mxu0
        %744 = vmatprep.mubr.f32.mxu0 0.0
        %745 = vmatmul.mubr.f32.gmra.mxu0 %v571
        %v746 = vpop.f32.mrf.mxu0
        %v747 = vadd.f32 0.0, %v746
        %v748 = vpop.f32.mrf.mxu0
        %749 = vdwg.mxu0
        %v750 = vlaneseq
        %v751 = vshrl.u32 %v750, 7
        %v752 = vadd.s32 %v751, 8
        %v753 = vadd.s32 %v751, 16
        %v754 = vadd.s32 %v751, 24
        %v755 = vadd.s32 %v751, 32
        %v756 = vadd.s32 %v751, 40
        %v757 = vadd.s32 %v751, 48
        %v758 = vadd.s32 %v751, 56
        %v759 = vadd.s32 %v751, 64
        %v760 = vadd.s32 %v751, 72
        %v761 = vadd.s32 %v751, 80
        %v762 = vadd.s32 %v751, 88
        %v763 = vadd.s32 %v751, 96
        %v764 = vadd.s32 %v751, 104
        %v765 = vadd.s32 %v751, 112
        %v766 = vadd.s32 %v751, 120
        %783 = vrot.lane.b32.xlu0 %v672, 127
        %v784 = vpop.permute.xlu0 %783
        %785 = vrot.lane.b32.xlu0 %v677, 127
        %v786 = vpop.permute.xlu0 %785
        %787 = vrot.lane.b32.xlu0 %v682, 127
        %v788 = vpop.permute.xlu0 %787
        %789 = vrot.lane.b32.xlu0 %v687, 127
        %v790 = vpop.permute.xlu0 %789
        %791 = vrot.lane.b32.xlu0 %v692, 127
        %v792 = vpop.permute.xlu0 %791
        %793 = vrot.lane.b32.xlu0 %v697, 127
        %v794 = vpop.permute.xlu0 %793
        %795 = vrot.lane.b32.xlu0 %v702, 127
        %v796 = vpop.permute.xlu0 %795
        %797 = vrot.lane.b32.xlu0 %v707, 127
        %v798 = vpop.permute.xlu0 %797
        %799 = vrot.lane.b32.xlu0 %v712, 127
        %v800 = vpop.permute.xlu0 %799
        %801 = vrot.lane.b32.xlu0 %v717, 127
        %v802 = vpop.permute.xlu0 %801
        %803 = vrot.lane.b32.xlu0 %v722, 127
        %v804 = vpop.permute.xlu0 %803
        %805 = vrot.lane.b32.xlu0 %v727, 127
        %v806 = vpop.permute.xlu0 %805
        %807 = vrot.lane.b32.xlu0 %v732, 127
        %v808 = vpop.permute.xlu0 %807
        %809 = vrot.lane.b32.xlu0 %v737, 127
        %v810 = vpop.permute.xlu0 %809
        %811 = vrot.lane.b32.xlu0 %v742, 127
        %v812 = vpop.permute.xlu0 %811
        %813 = vrot.lane.b32.xlu0 %v747, 127
        %v814 = vpop.permute.xlu0 %813
        %v831 = vand.u32 %v751, 1
        %v832 = vand.u32 %v752, 1
        %v833 = vand.u32 %v753, 1
        %v834 = vand.u32 %v754, 1
        %v835 = vand.u32 %v755, 1
        %v836 = vand.u32 %v756, 1
        %v837 = vand.u32 %v757, 1
        %v838 = vand.u32 %v758, 1
        %v839 = vand.u32 %v759, 1
        %v840 = vand.u32 %v760, 1
        %v841 = vand.u32 %v761, 1
        %v842 = vand.u32 %v762, 1
        %v843 = vand.u32 %v763, 1
        %v844 = vand.u32 %v764, 1
        %v845 = vand.u32 %v765, 1
        %v846 = vand.u32 %v766, 1
        %vm847 = vcmp.ne.s32.totalorder %v831, 0
        %vm848 = vcmp.ne.s32.totalorder %v832, 0
        %vm849 = vcmp.ne.s32.totalorder %v833, 0
        %vm850 = vcmp.ne.s32.totalorder %v834, 0
        %vm851 = vcmp.ne.s32.totalorder %v835, 0
        %vm852 = vcmp.ne.s32.totalorder %v836, 0
        %vm853 = vcmp.ne.s32.totalorder %v837, 0
        %vm854 = vcmp.ne.s32.totalorder %v838, 0
        %vm855 = vcmp.ne.s32.totalorder %v839, 0
        %vm856 = vcmp.ne.s32.totalorder %v840, 0
        %vm857 = vcmp.ne.s32.totalorder %v841, 0
        %vm858 = vcmp.ne.s32.totalorder %v842, 0
        %vm859 = vcmp.ne.s32.totalorder %v843, 0
        %vm860 = vcmp.ne.s32.totalorder %v844, 0
        %vm861 = vcmp.ne.s32.totalorder %v845, 0
        %vm862 = vcmp.ne.s32.totalorder %v846, 0
        %v863 = vsel %vm847, %v784, %v672
        %v864 = vsel %vm848, %v786, %v677
        %v865 = vsel %vm849, %v788, %v682
        %v866 = vsel %vm850, %v790, %v687
        %v867 = vsel %vm851, %v792, %v692
        %v868 = vsel %vm852, %v794, %v697
        %v869 = vsel %vm853, %v796, %v702
        %v870 = vsel %vm854, %v798, %v707
        %v871 = vsel %vm855, %v800, %v712
        %v872 = vsel %vm856, %v802, %v717
        %v873 = vsel %vm857, %v804, %v722
        %v874 = vsel %vm858, %v806, %v727
        %v875 = vsel %vm859, %v808, %v732
        %v876 = vsel %vm860, %v810, %v737
        %v877 = vsel %vm861, %v812, %v742
        %v878 = vsel %vm862, %v814, %v747
        %895 = vrot.lane.b32.xlu0 %v863, 126
        %v896 = vpop.permute.xlu0 %895
        %897 = vrot.lane.b32.xlu0 %v864, 126
        %v898 = vpop.permute.xlu0 %897
        %899 = vrot.lane.b32.xlu0 %v865, 126
        %v900 = vpop.permute.xlu0 %899
        %901 = vrot.lane.b32.xlu0 %v866, 126
        %v902 = vpop.permute.xlu0 %901
        %903 = vrot.lane.b32.xlu0 %v867, 126
        %v904 = vpop.permute.xlu0 %903
        %905 = vrot.lane.b32.xlu0 %v868, 126
        %v906 = vpop.permute.xlu0 %905
        %907 = vrot.lane.b32.xlu0 %v869, 126
        %v908 = vpop.permute.xlu0 %907
        %909 = vrot.lane.b32.xlu0 %v870, 126
        %v910 = vpop.permute.xlu0 %909
        %911 = vrot.lane.b32.xlu0 %v871, 126
        %v912 = vpop.permute.xlu0 %911
        %913 = vrot.lane.b32.xlu0 %v872, 126
        %v914 = vpop.permute.xlu0 %913
        %915 = vrot.lane.b32.xlu0 %v873, 126
        %v916 = vpop.permute.xlu0 %915
        %917 = vrot.lane.b32.xlu0 %v874, 126
        %v918 = vpop.permute.xlu0 %917
        %919 = vrot.lane.b32.xlu0 %v875, 126
        %v920 = vpop.permute.xlu0 %919
        %921 = vrot.lane.b32.xlu0 %v876, 126
        %v922 = vpop.permute.xlu0 %921
        %923 = vrot.lane.b32.xlu0 %v877, 126
        %v924 = vpop.permute.xlu0 %923
        %925 = vrot.lane.b32.xlu0 %v878, 126
        %v926 = vpop.permute.xlu0 %925
        %v943 = vand.u32 %v751, 2
        %v944 = vand.u32 %v752, 2
        %v945 = vand.u32 %v753, 2
        %v946 = vand.u32 %v754, 2
        %v947 = vand.u32 %v755, 2
        %v948 = vand.u32 %v756, 2
        %v949 = vand.u32 %v757, 2
        %v950 = vand.u32 %v758, 2
        %v951 = vand.u32 %v759, 2
        %v952 = vand.u32 %v760, 2
        %v953 = vand.u32 %v761, 2
        %v954 = vand.u32 %v762, 2
        %v955 = vand.u32 %v763, 2
        %v956 = vand.u32 %v764, 2
        %v957 = vand.u32 %v765, 2
        %v958 = vand.u32 %v766, 2
        %vm959 = vcmp.ne.s32.totalorder %v943, 0
        %vm960 = vcmp.ne.s32.totalorder %v944, 0
        %vm961 = vcmp.ne.s32.totalorder %v945, 0
        %vm962 = vcmp.ne.s32.totalorder %v946, 0
        %vm963 = vcmp.ne.s32.totalorder %v947, 0
        %vm964 = vcmp.ne.s32.totalorder %v948, 0
        %vm965 = vcmp.ne.s32.totalorder %v949, 0
        %vm966 = vcmp.ne.s32.totalorder %v950, 0
        %vm967 = vcmp.ne.s32.totalorder %v951, 0
        %vm968 = vcmp.ne.s32.totalorder %v952, 0
        %vm969 = vcmp.ne.s32.totalorder %v953, 0
        %vm970 = vcmp.ne.s32.totalorder %v954, 0
        %vm971 = vcmp.ne.s32.totalorder %v955, 0
        %vm972 = vcmp.ne.s32.totalorder %v956, 0
        %vm973 = vcmp.ne.s32.totalorder %v957, 0
        %vm974 = vcmp.ne.s32.totalorder %v958, 0
        %v975 = vsel %vm959, %v896, %v863
        %v976 = vsel %vm960, %v898, %v864
        %v977 = vsel %vm961, %v900, %v865
        %v978 = vsel %vm962, %v902, %v866
        %v979 = vsel %vm963, %v904, %v867
        %v980 = vsel %vm964, %v906, %v868
        %v981 = vsel %vm965, %v908, %v869
        %v982 = vsel %vm966, %v910, %v870
        %v983 = vsel %vm967, %v912, %v871
        %v984 = vsel %vm968, %v914, %v872
        %v985 = vsel %vm969, %v916, %v873
        %v986 = vsel %vm970, %v918, %v874
        %v987 = vsel %vm971, %v920, %v875
        %v988 = vsel %vm972, %v922, %v876
        %v989 = vsel %vm973, %v924, %v877
        %v990 = vsel %vm974, %v926, %v878
        %1007 = vrot.lane.b32.xlu0 %v975, 124
        %v1008 = vpop.permute.xlu0 %1007
        %1009 = vrot.lane.b32.xlu0 %v976, 124
        %v1010 = vpop.permute.xlu0 %1009
        %1011 = vrot.lane.b32.xlu0 %v977, 124
        %v1012 = vpop.permute.xlu0 %1011
        %1013 = vrot.lane.b32.xlu0 %v978, 124
        %v1014 = vpop.permute.xlu0 %1013
        %1015 = vrot.lane.b32.xlu0 %v979, 124
        %v1016 = vpop.permute.xlu0 %1015
        %1017 = vrot.lane.b32.xlu0 %v980, 124
        %v1018 = vpop.permute.xlu0 %1017
        %1019 = vrot.lane.b32.xlu0 %v981, 124
        %v1020 = vpop.permute.xlu0 %1019
        %1021 = vrot.lane.b32.xlu0 %v982, 124
        %v1022 = vpop.permute.xlu0 %1021
        %1023 = vrot.lane.b32.xlu0 %v983, 124
        %v1024 = vpop.permute.xlu0 %1023
        %1025 = vrot.lane.b32.xlu0 %v984, 124
        %v1026 = vpop.permute.xlu0 %1025
        %1027 = vrot.lane.b32.xlu0 %v985, 124
        %v1028 = vpop.permute.xlu0 %1027
        %1029 = vrot.lane.b32.xlu0 %v986, 124
        %v1030 = vpop.permute.xlu0 %1029
        %1031 = vrot.lane.b32.xlu0 %v987, 124
        %v1032 = vpop.permute.xlu0 %1031
        %1033 = vrot.lane.b32.xlu0 %v988, 124
        %v1034 = vpop.permute.xlu0 %1033
        %1035 = vrot.lane.b32.xlu0 %v989, 124
        %v1036 = vpop.permute.xlu0 %1035
        %1037 = vrot.lane.b32.xlu0 %v990, 124
        %v1038 = vpop.permute.xlu0 %1037
        %v1055 = vand.u32 %v751, 4
        %v1056 = vand.u32 %v752, 4
        %v1057 = vand.u32 %v753, 4
        %v1058 = vand.u32 %v754, 4
        %v1059 = vand.u32 %v755, 4
        %v1060 = vand.u32 %v756, 4
        %v1061 = vand.u32 %v757, 4
        %v1062 = vand.u32 %v758, 4
        %v1063 = vand.u32 %v759, 4
        %v1064 = vand.u32 %v760, 4
        %v1065 = vand.u32 %v761, 4
        %v1066 = vand.u32 %v762, 4
        %v1067 = vand.u32 %v763, 4
        %v1068 = vand.u32 %v764, 4
        %v1069 = vand.u32 %v765, 4
        %v1070 = vand.u32 %v766, 4
        %vm1071 = vcmp.ne.s32.totalorder %v1055, 0
        %vm1072 = vcmp.ne.s32.totalorder %v1056, 0
        %vm1073 = vcmp.ne.s32.totalorder %v1057, 0
        %vm1074 = vcmp.ne.s32.totalorder %v1058, 0
        %vm1075 = vcmp.ne.s32.totalorder %v1059, 0
        %vm1076 = vcmp.ne.s32.totalorder %v1060, 0
        %vm1077 = vcmp.ne.s32.totalorder %v1061, 0
        %vm1078 = vcmp.ne.s32.totalorder %v1062, 0
        %vm1079 = vcmp.ne.s32.totalorder %v1063, 0
        %vm1080 = vcmp.ne.s32.totalorder %v1064, 0
        %vm1081 = vcmp.ne.s32.totalorder %v1065, 0
        %vm1082 = vcmp.ne.s32.totalorder %v1066, 0
        %vm1083 = vcmp.ne.s32.totalorder %v1067, 0
        %vm1084 = vcmp.ne.s32.totalorder %v1068, 0
        %vm1085 = vcmp.ne.s32.totalorder %v1069, 0
        %vm1086 = vcmp.ne.s32.totalorder %v1070, 0
        %v1087 = vsel %vm1071, %v1008, %v975
        %v1088 = vsel %vm1072, %v1010, %v976
        %v1089 = vsel %vm1073, %v1012, %v977
        %v1090 = vsel %vm1074, %v1014, %v978
        %v1091 = vsel %vm1075, %v1016, %v979
        %v1092 = vsel %vm1076, %v1018, %v980
        %v1093 = vsel %vm1077, %v1020, %v981
        %v1094 = vsel %vm1078, %v1022, %v982
        %v1095 = vsel %vm1079, %v1024, %v983
        %v1096 = vsel %vm1080, %v1026, %v984
        %v1097 = vsel %vm1081, %v1028, %v985
        %v1098 = vsel %vm1082, %v1030, %v986
        %v1099 = vsel %vm1083, %v1032, %v987
        %v1100 = vsel %vm1084, %v1034, %v988
        %v1101 = vsel %vm1085, %v1036, %v989
        %v1102 = vsel %vm1086, %v1038, %v990
        %1119 = vrot.lane.b32.xlu0 %v1087, 120
        %v1120 = vpop.permute.xlu0 %1119
        %1121 = vrot.lane.b32.xlu0 %v1088, 120
        %v1122 = vpop.permute.xlu0 %1121
        %1123 = vrot.lane.b32.xlu0 %v1089, 120
        %v1124 = vpop.permute.xlu0 %1123
        %1125 = vrot.lane.b32.xlu0 %v1090, 120
        %v1126 = vpop.permute.xlu0 %1125
        %1127 = vrot.lane.b32.xlu0 %v1091, 120
        %v1128 = vpop.permute.xlu0 %1127
        %1129 = vrot.lane.b32.xlu0 %v1092, 120
        %v1130 = vpop.permute.xlu0 %1129
        %1131 = vrot.lane.b32.xlu0 %v1093, 120
        %v1132 = vpop.permute.xlu0 %1131
        %1133 = vrot.lane.b32.xlu0 %v1094, 120
        %v1134 = vpop.permute.xlu0 %1133
        %1135 = vrot.lane.b32.xlu0 %v1095, 120
        %v1136 = vpop.permute.xlu0 %1135
        %1137 = vrot.lane.b32.xlu0 %v1096, 120
        %v1138 = vpop.permute.xlu0 %1137
        %1139 = vrot.lane.b32.xlu0 %v1097, 120
        %v1140 = vpop.permute.xlu0 %1139
        %1141 = vrot.lane.b32.xlu0 %v1098, 120
        %v1142 = vpop.permute.xlu0 %1141
        %1143 = vrot.lane.b32.xlu0 %v1099, 120
        %v1144 = vpop.permute.xlu0 %1143
        %1145 = vrot.lane.b32.xlu0 %v1100, 120
        %v1146 = vpop.permute.xlu0 %1145
        %1147 = vrot.lane.b32.xlu0 %v1101, 120
        %v1148 = vpop.permute.xlu0 %1147
        %1149 = vrot.lane.b32.xlu0 %v1102, 120
        %v1150 = vpop.permute.xlu0 %1149
        %v1167 = vand.u32 %v751, 8
        %v1168 = vand.u32 %v752, 8
        %v1169 = vand.u32 %v753, 8
        %v1170 = vand.u32 %v754, 8
        %v1171 = vand.u32 %v755, 8
        %v1172 = vand.u32 %v756, 8
        %v1173 = vand.u32 %v757, 8
        %v1174 = vand.u32 %v758, 8
        %v1175 = vand.u32 %v759, 8
        %v1176 = vand.u32 %v760, 8
        %v1177 = vand.u32 %v761, 8
        %v1178 = vand.u32 %v762, 8
        %v1179 = vand.u32 %v763, 8
        %v1180 = vand.u32 %v764, 8
        %v1181 = vand.u32 %v765, 8
        %v1182 = vand.u32 %v766, 8
        %vm1183 = vcmp.ne.s32.totalorder %v1167, 0
        %vm1184 = vcmp.ne.s32.totalorder %v1168, 0
        %vm1185 = vcmp.ne.s32.totalorder %v1169, 0
        %vm1186 = vcmp.ne.s32.totalorder %v1170, 0
        %vm1187 = vcmp.ne.s32.totalorder %v1171, 0
        %vm1188 = vcmp.ne.s32.totalorder %v1172, 0
        %vm1189 = vcmp.ne.s32.totalorder %v1173, 0
        %vm1190 = vcmp.ne.s32.totalorder %v1174, 0
        %vm1191 = vcmp.ne.s32.totalorder %v1175, 0
        %vm1192 = vcmp.ne.s32.totalorder %v1176, 0
        %vm1193 = vcmp.ne.s32.totalorder %v1177, 0
        %vm1194 = vcmp.ne.s32.totalorder %v1178, 0
        %vm1195 = vcmp.ne.s32.totalorder %v1179, 0
        %vm1196 = vcmp.ne.s32.totalorder %v1180, 0
        %vm1197 = vcmp.ne.s32.totalorder %v1181, 0
        %vm1198 = vcmp.ne.s32.totalorder %v1182, 0
        %v1199 = vsel %vm1183, %v1120, %v1087
        %v1200 = vsel %vm1184, %v1122, %v1088
        %v1201 = vsel %vm1185, %v1124, %v1089
        %v1202 = vsel %vm1186, %v1126, %v1090
        %v1203 = vsel %vm1187, %v1128, %v1091
        %v1204 = vsel %vm1188, %v1130, %v1092
        %v1205 = vsel %vm1189, %v1132, %v1093
        %v1206 = vsel %vm1190, %v1134, %v1094
        %v1207 = vsel %vm1191, %v1136, %v1095
        %v1208 = vsel %vm1192, %v1138, %v1096
        %v1209 = vsel %vm1193, %v1140, %v1097
        %v1210 = vsel %vm1194, %v1142, %v1098
        %v1211 = vsel %vm1195, %v1144, %v1099
        %v1212 = vsel %vm1196, %v1146, %v1100
        %v1213 = vsel %vm1197, %v1148, %v1101
        %v1214 = vsel %vm1198, %v1150, %v1102
        %1231 = vrot.lane.b32.xlu0 %v1199, 112
        %v1232 = vpop.permute.xlu0 %1231
        %1233 = vrot.lane.b32.xlu0 %v1200, 112
        %v1234 = vpop.permute.xlu0 %1233
        %1235 = vrot.lane.b32.xlu0 %v1201, 112
        %v1236 = vpop.permute.xlu0 %1235
        %1237 = vrot.lane.b32.xlu0 %v1202, 112
        %v1238 = vpop.permute.xlu0 %1237
        %1239 = vrot.lane.b32.xlu0 %v1203, 112
        %v1240 = vpop.permute.xlu0 %1239
        %1241 = vrot.lane.b32.xlu0 %v1204, 112
        %v1242 = vpop.permute.xlu0 %1241
        %1243 = vrot.lane.b32.xlu0 %v1205, 112
        %v1244 = vpop.permute.xlu0 %1243
        %1245 = vrot.lane.b32.xlu0 %v1206, 112
        %v1246 = vpop.permute.xlu0 %1245
        %1247 = vrot.lane.b32.xlu0 %v1207, 112
        %v1248 = vpop.permute.xlu0 %1247
        %1249 = vrot.lane.b32.xlu0 %v1208, 112
        %v1250 = vpop.permute.xlu0 %1249
        %1251 = vrot.lane.b32.xlu0 %v1209, 112
        %v1252 = vpop.permute.xlu0 %1251
        %1253 = vrot.lane.b32.xlu0 %v1210, 112
        %v1254 = vpop.permute.xlu0 %1253
        %1255 = vrot.lane.b32.xlu0 %v1211, 112
        %v1256 = vpop.permute.xlu0 %1255
        %1257 = vrot.lane.b32.xlu0 %v1212, 112
        %v1258 = vpop.permute.xlu0 %1257
        %1259 = vrot.lane.b32.xlu0 %v1213, 112
        %v1260 = vpop.permute.xlu0 %1259
        %1261 = vrot.lane.b32.xlu0 %v1214, 112
        %v1262 = vpop.permute.xlu0 %1261
        %v1279 = vand.u32 %v751, 16
        %v1280 = vand.u32 %v752, 16
        %v1281 = vand.u32 %v753, 16
        %v1282 = vand.u32 %v754, 16
        %v1283 = vand.u32 %v755, 16
        %v1284 = vand.u32 %v756, 16
        %v1285 = vand.u32 %v757, 16
        %v1286 = vand.u32 %v758, 16
        %v1287 = vand.u32 %v759, 16
        %v1288 = vand.u32 %v760, 16
        %v1289 = vand.u32 %v761, 16
        %v1290 = vand.u32 %v762, 16
        %v1291 = vand.u32 %v763, 16
        %v1292 = vand.u32 %v764, 16
        %v1293 = vand.u32 %v765, 16
        %v1294 = vand.u32 %v766, 16
        %vm1295 = vcmp.ne.s32.totalorder %v1279, 0
        %vm1296 = vcmp.ne.s32.totalorder %v1280, 0
        %vm1297 = vcmp.ne.s32.totalorder %v1281, 0
        %vm1298 = vcmp.ne.s32.totalorder %v1282, 0
        %vm1299 = vcmp.ne.s32.totalorder %v1283, 0
        %vm1300 = vcmp.ne.s32.totalorder %v1284, 0
        %vm1301 = vcmp.ne.s32.totalorder %v1285, 0
        %vm1302 = vcmp.ne.s32.totalorder %v1286, 0
        %vm1303 = vcmp.ne.s32.totalorder %v1287, 0
        %vm1304 = vcmp.ne.s32.totalorder %v1288, 0
        %vm1305 = vcmp.ne.s32.totalorder %v1289, 0
        %vm1306 = vcmp.ne.s32.totalorder %v1290, 0
        %vm1307 = vcmp.ne.s32.totalorder %v1291, 0
        %vm1308 = vcmp.ne.s32.totalorder %v1292, 0
        %vm1309 = vcmp.ne.s32.totalorder %v1293, 0
        %vm1310 = vcmp.ne.s32.totalorder %v1294, 0
        %v1311 = vsel %vm1295, %v1232, %v1199
        %v1312 = vsel %vm1296, %v1234, %v1200
        %v1313 = vsel %vm1297, %v1236, %v1201
        %v1314 = vsel %vm1298, %v1238, %v1202
        %v1315 = vsel %vm1299, %v1240, %v1203
        %v1316 = vsel %vm1300, %v1242, %v1204
        %v1317 = vsel %vm1301, %v1244, %v1205
        %v1318 = vsel %vm1302, %v1246, %v1206
        %v1319 = vsel %vm1303, %v1248, %v1207
        %v1320 = vsel %vm1304, %v1250, %v1208
        %v1321 = vsel %vm1305, %v1252, %v1209
        %v1322 = vsel %vm1306, %v1254, %v1210
        %v1323 = vsel %vm1307, %v1256, %v1211
        %v1324 = vsel %vm1308, %v1258, %v1212
        %v1325 = vsel %vm1309, %v1260, %v1213
        %v1326 = vsel %vm1310, %v1262, %v1214
        %1343 = vrot.lane.b32.xlu0 %v1311, 96
        %v1344 = vpop.permute.xlu0 %1343
        %1345 = vrot.lane.b32.xlu0 %v1312, 96
        %v1346 = vpop.permute.xlu0 %1345
        %1347 = vrot.lane.b32.xlu0 %v1313, 96
        %v1348 = vpop.permute.xlu0 %1347
        %1349 = vrot.lane.b32.xlu0 %v1314, 96
        %v1350 = vpop.permute.xlu0 %1349
        %1351 = vrot.lane.b32.xlu0 %v1315, 96
        %v1352 = vpop.permute.xlu0 %1351
        %1353 = vrot.lane.b32.xlu0 %v1316, 96
        %v1354 = vpop.permute.xlu0 %1353
        %1355 = vrot.lane.b32.xlu0 %v1317, 96
        %v1356 = vpop.permute.xlu0 %1355
        %1357 = vrot.lane.b32.xlu0 %v1318, 96
        %v1358 = vpop.permute.xlu0 %1357
        %1359 = vrot.lane.b32.xlu0 %v1319, 96
        %v1360 = vpop.permute.xlu0 %1359
        %1361 = vrot.lane.b32.xlu0 %v1320, 96
        %v1362 = vpop.permute.xlu0 %1361
        %1363 = vrot.lane.b32.xlu0 %v1321, 96
        %v1364 = vpop.permute.xlu0 %1363
        %1365 = vrot.lane.b32.xlu0 %v1322, 96
        %v1366 = vpop.permute.xlu0 %1365
        %1367 = vrot.lane.b32.xlu0 %v1323, 96
        %v1368 = vpop.permute.xlu0 %1367
        %1369 = vrot.lane.b32.xlu0 %v1324, 96
        %v1370 = vpop.permute.xlu0 %1369
        %1371 = vrot.lane.b32.xlu0 %v1325, 96
        %v1372 = vpop.permute.xlu0 %1371
        %1373 = vrot.lane.b32.xlu0 %v1326, 96
        %v1374 = vpop.permute.xlu0 %1373
        %v1391 = vand.u32 %v751, 32
        %v1392 = vand.u32 %v752, 32
        %v1393 = vand.u32 %v753, 32
        %v1394 = vand.u32 %v754, 32
        %v1395 = vand.u32 %v755, 32
        %v1396 = vand.u32 %v756, 32
        %v1397 = vand.u32 %v757, 32
        %v1398 = vand.u32 %v758, 32
        %v1399 = vand.u32 %v759, 32
        %v1400 = vand.u32 %v760, 32
        %v1401 = vand.u32 %v761, 32
        %v1402 = vand.u32 %v762, 32
        %v1403 = vand.u32 %v763, 32
        %v1404 = vand.u32 %v764, 32
        %v1405 = vand.u32 %v765, 32
        %v1406 = vand.u32 %v766, 32
        %vm1407 = vcmp.ne.s32.totalorder %v1391, 0
        %vm1408 = vcmp.ne.s32.totalorder %v1392, 0
        %vm1409 = vcmp.ne.s32.totalorder %v1393, 0
        %vm1410 = vcmp.ne.s32.totalorder %v1394, 0
        %vm1411 = vcmp.ne.s32.totalorder %v1395, 0
        %vm1412 = vcmp.ne.s32.totalorder %v1396, 0
        %vm1413 = vcmp.ne.s32.totalorder %v1397, 0
        %vm1414 = vcmp.ne.s32.totalorder %v1398, 0
        %vm1415 = vcmp.ne.s32.totalorder %v1399, 0
        %vm1416 = vcmp.ne.s32.totalorder %v1400, 0
        %vm1417 = vcmp.ne.s32.totalorder %v1401, 0
        %vm1418 = vcmp.ne.s32.totalorder %v1402, 0
        %vm1419 = vcmp.ne.s32.totalorder %v1403, 0
        %vm1420 = vcmp.ne.s32.totalorder %v1404, 0
        %vm1421 = vcmp.ne.s32.totalorder %v1405, 0
        %vm1422 = vcmp.ne.s32.totalorder %v1406, 0
        %v1423 = vsel %vm1407, %v1344, %v1311
        %v1424 = vsel %vm1408, %v1346, %v1312
        %v1425 = vsel %vm1409, %v1348, %v1313
        %v1426 = vsel %vm1410, %v1350, %v1314
        %v1427 = vsel %vm1411, %v1352, %v1315
        %v1428 = vsel %vm1412, %v1354, %v1316
        %v1429 = vsel %vm1413, %v1356, %v1317
        %v1430 = vsel %vm1414, %v1358, %v1318
        %v1431 = vsel %vm1415, %v1360, %v1319
        %v1432 = vsel %vm1416, %v1362, %v1320
        %v1433 = vsel %vm1417, %v1364, %v1321
        %v1434 = vsel %vm1418, %v1366, %v1322
        %v1435 = vsel %vm1419, %v1368, %v1323
        %v1436 = vsel %vm1420, %v1370, %v1324
        %v1437 = vsel %vm1421, %v1372, %v1325
        %v1438 = vsel %vm1422, %v1374, %v1326
        %1455 = vrot.lane.b32.xlu0 %v1423, 64
        %v1456 = vpop.permute.xlu0 %1455
        %1457 = vrot.lane.b32.xlu0 %v1424, 64
        %v1458 = vpop.permute.xlu0 %1457
        %1459 = vrot.lane.b32.xlu0 %v1425, 64
        %v1460 = vpop.permute.xlu0 %1459
        %1461 = vrot.lane.b32.xlu0 %v1426, 64
        %v1462 = vpop.permute.xlu0 %1461
        %1463 = vrot.lane.b32.xlu0 %v1427, 64
        %v1464 = vpop.permute.xlu0 %1463
        %1465 = vrot.lane.b32.xlu0 %v1428, 64
        %v1466 = vpop.permute.xlu0 %1465
        %1467 = vrot.lane.b32.xlu0 %v1429, 64
        %v1468 = vpop.permute.xlu0 %1467
        %1469 = vrot.lane.b32.xlu0 %v1430, 64
        %v1470 = vpop.permute.xlu0 %1469
        %1471 = vrot.lane.b32.xlu0 %v1431, 64
        %v1472 = vpop.permute.xlu0 %1471
        %1473 = vrot.lane.b32.xlu0 %v1432, 64
        %v1474 = vpop.permute.xlu0 %1473
        %1475 = vrot.lane.b32.xlu0 %v1433, 64
        %v1476 = vpop.permute.xlu0 %1475
        %1477 = vrot.lane.b32.xlu0 %v1434, 64
        %v1478 = vpop.permute.xlu0 %1477
        %1479 = vrot.lane.b32.xlu0 %v1435, 64
        %v1480 = vpop.permute.xlu0 %1479
        %1481 = vrot.lane.b32.xlu0 %v1436, 64
        %v1482 = vpop.permute.xlu0 %1481
        %1483 = vrot.lane.b32.xlu0 %v1437, 64
        %v1484 = vpop.permute.xlu0 %1483
        %1485 = vrot.lane.b32.xlu0 %v1438, 64
        %v1486 = vpop.permute.xlu0 %1485
        %v1503 = vand.u32 %v751, 64
        %v1504 = vand.u32 %v752, 64
        %v1505 = vand.u32 %v753, 64
        %v1506 = vand.u32 %v754, 64
        %v1507 = vand.u32 %v755, 64
        %v1508 = vand.u32 %v756, 64
        %v1509 = vand.u32 %v757, 64
        %v1510 = vand.u32 %v758, 64
        %v1511 = vand.u32 %v759, 64
        %v1512 = vand.u32 %v760, 64
        %v1513 = vand.u32 %v761, 64
        %v1514 = vand.u32 %v762, 64
        %v1515 = vand.u32 %v763, 64
        %v1516 = vand.u32 %v764, 64
        %v1517 = vand.u32 %v765, 64
        %v1518 = vand.u32 %v766, 64
        %vm1519 = vcmp.ne.s32.totalorder %v1503, 0
        %vm1520 = vcmp.ne.s32.totalorder %v1504, 0
        %vm1521 = vcmp.ne.s32.totalorder %v1505, 0
        %vm1522 = vcmp.ne.s32.totalorder %v1506, 0
        %vm1523 = vcmp.ne.s32.totalorder %v1507, 0
        %vm1524 = vcmp.ne.s32.totalorder %v1508, 0
        %vm1525 = vcmp.ne.s32.totalorder %v1509, 0
        %vm1526 = vcmp.ne.s32.totalorder %v1510, 0
        %vm1527 = vcmp.ne.s32.totalorder %v1511, 0
        %vm1528 = vcmp.ne.s32.totalorder %v1512, 0
        %vm1529 = vcmp.ne.s32.totalorder %v1513, 0
        %vm1530 = vcmp.ne.s32.totalorder %v1514, 0
        %vm1531 = vcmp.ne.s32.totalorder %v1515, 0
        %vm1532 = vcmp.ne.s32.totalorder %v1516, 0
        %vm1533 = vcmp.ne.s32.totalorder %v1517, 0
        %vm1534 = vcmp.ne.s32.totalorder %v1518, 0
        %v1535 = vsel %vm1519, %v1456, %v1423
        %v1536 = vsel %vm1520, %v1458, %v1424
        %v1537 = vsel %vm1521, %v1460, %v1425
        %v1538 = vsel %vm1522, %v1462, %v1426
        %v1539 = vsel %vm1523, %v1464, %v1427
        %v1540 = vsel %vm1524, %v1466, %v1428
        %v1541 = vsel %vm1525, %v1468, %v1429
        %v1542 = vsel %vm1526, %v1470, %v1430
        %v1543 = vsel %vm1527, %v1472, %v1431
        %v1544 = vsel %vm1528, %v1474, %v1432
        %v1545 = vsel %vm1529, %v1476, %v1433
        %v1546 = vsel %vm1530, %v1478, %v1434
        %v1547 = vsel %vm1531, %v1480, %v1435
        %v1548 = vsel %vm1532, %v1482, %v1436
        %v1549 = vsel %vm1533, %v1484, %v1437
        %v1550 = vsel %vm1534, %v1486, %v1438
        %v1551 = vadd.f32 %v1535, %v1536
        %v1552 = vadd.f32 %v1551, %v1537
        %v1553 = vadd.f32 %v1552, %v1538
        %v1554 = vadd.f32 %v1553, %v1539
        %v1555 = vadd.f32 %v1554, %v1540
        %v1556 = vadd.f32 %v1555, %v1541
        %v1557 = vadd.f32 %v1556, %v1542
        %v1558 = vadd.f32 %v1557, %v1543
        %v1559 = vadd.f32 %v1558, %v1544
        %v1560 = vadd.f32 %v1559, %v1545
        %v1561 = vadd.f32 %v1560, %v1546
        %v1562 = vadd.f32 %v1561, %v1547
        %v1563 = vadd.f32 %v1562, %v1548
        %v1564 = vadd.f32 %v1563, %v1549
        %v1565 = vadd.f32 %v1564, %v1550
        %v1566 = vrot.slane %v1565, 4
        %v1567 = vadd.f32 %v1565, %v1566
        %v1568 = vrot.slane %v1567, 2
        %v1569 = vadd.f32 %v1567, %v1568
        %v1570 = vrot.slane %v1569, 1
        %v1571 = vadd.f32 %v1569, %v1570
        %v1572 = vmul.f32 %v1571, 0.03125
        %1573 = vst [vmem:[%s197] sm:$0x1] %v1572
        %p1574 = scmp.lt.s32.totalorder %s19, 1
        %s1575 = scalar_select %p1574, %s19, 1
        %s1576 = smul.addr %s1575, 16
        %s1577 = smul.addr %s1576, 8
        %s1578 = scalar_lea.vmem %s3, %s1577
        %s1579 = sand.u32 %s121, 1
        %s1580 = scalar_lea.sflag [#allocation3], %s1579
        %s1581 = sand.u32 %s121, 1
        %s1582 = scalar_lea.vmem [#allocation2], %s1581
        // Predicated region
        $region33: #{tpu_custom_call.1} parent=31 // pred_check
          %p1583 = pneg %p105
        $region34: #{tpu_custom_call.1} parent=31 // pred_check_branch
          %1585 = sbr.rel (%p1583) target = $region36
        $region35: #{tpu_custom_call.1} parent=31 // pred_region
          _
        $region36: #{tpu_custom_call.1} parent=31 // pred_fallthru
          _
        // Predicated region
        $region37: #{tpu_custom_call.1} parent=31 // pred_check
          %p1586 = pneg %p131
        $region38: #{tpu_custom_call.1} parent=31 // pred_check_branch
          %1588 = sbr.rel (%p1586) target = $region40
        $region39: #{tpu_custom_call.1} parent=31 // pred_region
          %s1590 = ssub.s32 16, 16
          %1591 = vsyncadd %s1580, %s1590
          %s1592 = smul.addr %s19, 16
          %s1593 = scalar_lea.hbm %s4, %s1592
          %s1595 = sshll.u32 %s1582, 4
          %s1596 = int_to_ptr.vmem [resolvable:$true] %s1595
          %1598 = dma.vmem_to_hbm [thread:$0]  %s1596, 16, %s1593, %s1580
        $region40: #{tpu_custom_call.1} parent=31 // pred_fallthru
          _
      $region32: #{tpu_custom_call.1} parent=5 // pred_fallthru
        _
      %p1599 = scmp.le.s32.totalorder 2, %s14
      // Predicated region
      $region41: #{tpu_custom_call.1} parent=5 // pred_check
        %p1600 = pneg %p1599
      $region42: #{tpu_custom_call.1} parent=5 // pred_check_branch
        %1602 = sbr.rel (%p1600) target = $region44
      $region43: #{tpu_custom_call.1} parent=5 // pred_region
        %s1603 = ssub.s32 %s14, 2
        // Predicated region
        $region45: #{tpu_custom_call.1} parent=43 // pred_check
          %p1604 = pneg %p111
        $region46: #{tpu_custom_call.1} parent=43 // pred_check_branch
          %1606 = sbr.rel (%p1604) target = $region48
        $region47: #{tpu_custom_call.1} parent=43 // pred_region
          %p1607 = scmp.lt.s32.totalorder %s20, 1
          %s1608 = scalar_select %p1607, %s20, 1
          %s1609 = smul.addr %s1608, 16
          %s1610 = smul.addr %s1609, 8
          %s1611 = scalar_lea.vmem %s3, %s1610
        $region48: #{tpu_custom_call.1} parent=43 // pred_fallthru
          _
        // Predicated region
        $region49: #{tpu_custom_call.1} parent=43 // pred_check
          %p1612 = pneg %p137
        $region50: #{tpu_custom_call.1} parent=43 // pred_check_branch
          %1614 = sbr.rel (%p1612) target = $region52
        $region51: #{tpu_custom_call.1} parent=43 // pred_region
          %s1615 = sand.u32 %s122, 1
          %s1616 = scalar_lea.sflag [#allocation3], %s1615
          %s1617 = sand.u32 %s122, 1
          %s1618 = scalar_lea.vmem [#allocation2], %s1617
          %1619 = dma.done %s1616, 16
        $region52: #{tpu_custom_call.1} parent=43 // pred_fallthru
          _
      $region44: #{tpu_custom_call.1} parent=5 // pred_fallthru
        _
    $region6: #{tpu_custom_call.1} parent=1 // loop_footer
      %s18 = sadd.s32 1, %s14
    $region7: #{tpu_custom_call.1} parent=1 // loop_footer_branch
      %13 = sbr.rel target = $region3
    $region8: #{tpu_custom_call.1} parent=1 // loop_exit
      _
    %1620 = vsyncpa [#allocation3], 1
    %s1621 = scalar_lea.sflag [#allocation3], 1
    %1622 = vsyncpa %s1621, 1

</llo_original>
